<compile_context>
chip_gen: v5e
topology: v5e:2x2
jax: 0.10.0
libtpu: 0.0.40
codegen_flags: <defaults>
</compile_context>

<pallas_src>
import math
import functools

import jax
import jax.numpy as jnp
import numpy as np
from jax.experimental import pallas as pl
from jax.experimental.pallas import tpu as pltpu  # noqa: F401  (TPU backend)

EPS = 1e-5
LANE = 128


# ----------------------------------------------------------------------------
# Fused whole-model Pallas kernel
# ----------------------------------------------------------------------------
def _model_kernel(x_ref, bias_ref,
                  wqkvT_ref, bqkv_ref, woT_ref, bo_ref,
                  g1_ref, beta1_ref, w1T_ref, b1_ref, w2T_ref, b2_ref,
                  g2_ref, beta2_ref, clsT_ref, clsb_ref,
                  o_ref, *, num_heads, num_layers):
    B, S, D = x_ref.shape
    Dh = D // num_heads
    bf16 = jnp.bfloat16

    bias = bias_ref[...]                                      # (B, S, S): 0 / -1e9
    h2d = x_ref[...].astype(jnp.float32).reshape(B * S, D)    # activations, f32

    for l in range(num_layers):                               # static unroll
        # ---- fused QKV projection: one (B*S, D) @ (D, 3D) bf16 matmul ----
        # (1/sqrt(Dh) is pre-folded into the Q columns of wqkvT / bqkv.)
        qkv = jnp.dot(h2d.astype(bf16), wqkvT_ref[l],
                      preferred_element_type=jnp.float32) + bqkv_ref[l]
        qkv3 = qkv.reshape(B, S, 3 * D)

        # ---- multi-head attention: heads unrolled, each batched over B ----
        head_outs = []
        for hd in range(num_heads):
            qh = qkv3[:, :, hd * Dh:(hd + 1) * Dh].astype(bf16)
            kh = qkv3[:, :, D + hd * Dh:D + (hd + 1) * Dh].astype(bf16)
            vh = qkv3[:, :, 2 * D + hd * Dh:2 * D + (hd + 1) * Dh].astype(bf16)
            s = jnp.einsum("bqd,bkd->bqk", qh, kh,
                           preferred_element_type=jnp.float32) + bias
            s_max = jnp.max(s, axis=-1, keepdims=True)
            e = jnp.exp(s - s_max)
            p = e * pl.reciprocal(jnp.sum(e, axis=-1, keepdims=True), approx=True)
            head_outs.append(
                jnp.einsum("bqk,bkd->bqd", p.astype(bf16), vh,
                           preferred_element_type=jnp.float32))
        attn = jnp.concatenate(head_outs, axis=-1).reshape(B * S, D)

        # ---- out-projection + residual + LayerNorm 1 (post-norm) ----
        attn = jnp.dot(attn.astype(bf16), woT_ref[l],
                       preferred_element_type=jnp.float32) + bo_ref[l]
        x1 = h2d + attn
        mu = jnp.mean(x1, axis=-1, keepdims=True)
        var = jnp.mean((x1 - mu) ** 2, axis=-1, keepdims=True)
        x1 = (x1 - mu) * jax.lax.rsqrt(var + EPS) * g1_ref[l] + beta1_ref[l]

        # ---- FFN (linear1 -> ReLU -> linear2); dropout = identity (eval) ----
        hdn = jnp.maximum(
            jnp.dot(x1.astype(bf16), w1T_ref[l],
                    preferred_element_type=jnp.float32) + b1_ref[l], 0.0)
        ff = jnp.dot(hdn.astype(bf16), w2T_ref[l],
                     preferred_element_type=jnp.float32) + b2_ref[l]

        # ---- residual + LayerNorm 2 ----
        x2 = x1 + ff
        mu2 = jnp.mean(x2, axis=-1, keepdims=True)
        var2 = jnp.mean((x2 - mu2) ** 2, axis=-1, keepdims=True)
        h2d = (x2 - mu2) * jax.lax.rsqrt(var2 + EPS) * g2_ref[l] + beta2_ref[l]

    # ---- fused classifier (f32, tiny, lane-padded to 128 outputs so the
    #      final stores are unmasked lane-dense `vst`); the wrapper selects
    #      the CLS row and the real class columns outside the kernel. ----
    logits = jnp.dot(h2d, clsT_ref[...],
                     preferred_element_type=jnp.float32) + clsb_ref[...]
    o_ref[...] = logits.astype(o_ref.dtype)


# ----------------------------------------------------------------------------
# Wrapper
# ----------------------------------------------------------------------------
def transformer_classifier_forward(x, attention_mask, layer_params, cls_w, cls_b,
                                   num_heads):
    """x: (B, S, D) f32, attention_mask: (B, S) with 1 = attend, 0 = padded."""
    B, S, D = x.shape
    L = len(layer_params)
    C = cls_w.shape[0]
    Cpad = int(pl.cdiv(C, LANE)) * LANE
    bf16 = jnp.bfloat16
    scale = 1.0 / math.sqrt(D // num_heads)

    # Stack per-layer weights on a leading axis, pre-transpose once in the
    # wrapper (no `.T` inside the kernel) and fold the attention scale into
    # the Q columns of the QKV projection; matmul weights go to bf16.
    def _qkvT(p):
        w = p["wqkv"].T                                                   # (D, 3D)
        return w.at[:, :D].multiply(scale)

    wqkvT = jnp.stack([_qkvT(p) for p in layer_params]).astype(bf16)      # (L, D, 3D)
    bqkv = jnp.stack([p["bqkv"].at[:, :D].multiply(scale)
                      for p in layer_params])                             # (L, 1, 3D)
    woT = jnp.stack([p["wo"].T for p in layer_params]).astype(bf16)       # (L, D, D)
    bo = jnp.stack([p["bo"] for p in layer_params])                       # (L, 1, D)
    g1 = jnp.stack([p["g1"] for p in layer_params])                       # (L, 1, D)
    beta1 = jnp.stack([p["beta1"] for p in layer_params])
    w1T = jnp.stack([p["w1"].T for p in layer_params]).astype(bf16)       # (L, D, H)
    b1 = jnp.stack([p["b1"] for p in layer_params])                       # (L, 1, H)
    w2T = jnp.stack([p["w2"].T for p in layer_params]).astype(bf16)       # (L, H, D)
    b2 = jnp.stack([p["b2"] for p in layer_params])                       # (L, 1, D)
    g2 = jnp.stack([p["g2"] for p in layer_params])
    beta2 = jnp.stack([p["beta2"] for p in layer_params])

    # src_key_padding_mask = ~attention_mask  ->  additive -1e9 where padded,
    # pre-broadcast to (B, S, S) so the kernel never re-emits the broadcast.
    mask = attention_mask.astype(jnp.float32).reshape(B, 1, S)
    neg_bias = jnp.broadcast_to((1.0 - mask) * (-1e9), (B, S, S))         # (B, S, S)

    # Lane-padded classifier (real logits live in the first C columns).
    clsT = jnp.zeros((D, Cpad), jnp.float32).at[:, :C].set(cls_w.T)       # (D, Cpad)
    clsb = jnp.zeros((1, Cpad), jnp.float32).at[:, :C].set(cls_b)         # (1, Cpad)

    kernel = functools.partial(_model_kernel, num_heads=num_heads, num_layers=L)
    logits_all = pl.pallas_call(
        kernel,
        out_shape=jax.ShapeDtypeStruct((B * S, Cpad), jnp.float32),
    )(x, neg_bias,
      wqkvT, bqkv, woT, bo, g1, beta1, w1T, b1, w2T, b2, g2, beta2,
      clsT, clsb)

    # CLS token = position 0 of each sequence; keep only the real C classes.
    return logits_all.reshape(B, S, Cpad)[:, 0, :C]


# ----------------------------------------------------------------------------
# Pure-JAX f32 reference (same math, no Pallas) for validation
# ----------------------------------------------------------------------------
def _layernorm(x, g, b):
    mu = jnp.mean(x, axis=-1, keepdims=True)
    var = jnp.mean((x - mu) ** 2, axis=-1, keepdims=True)
    return (x - mu) * jax.lax.rsqrt(var + EPS) * g + b


def ref_layer(x, mask, p, num_heads):
    B, S, D = x.shape
    Dh = D // num_heads
    qkv = x @ p["wqkv"].T + p["bqkv"][0]
    q, k, v = qkv[..., :D], qkv[..., D:2 * D], qkv[..., 2 * D:]
    q = q.reshape(B, S, num_heads, Dh).transpose(0, 2, 1, 3)
    k = k.reshape(B, S, num_heads, Dh).transpose(0, 2, 1, 3)
    v = v.reshape(B, S, num_heads, Dh).transpose(0, 2, 1, 3)
    s = jnp.einsum("bhqd,bhkd->bhqk", q, k) / math.sqrt(Dh)
    s = s + jnp.where(mask[:, None, None, :] > 0.5, 0.0, -1e9)
    pa = jax.nn.softmax(s, axis=-1)
    attn = jnp.einsum("bhqk,bhkd->bhqd", pa, v).transpose(0, 2, 1, 3).reshape(B, S, D)
    attn = attn @ p["wo"].T + p["bo"][0]
    x1 = _layernorm(x + attn, p["g1"][0], p["beta1"][0])
    ff = jnp.maximum(x1 @ p["w1"].T + p["b1"][0], 0.0) @ p["w2"].T + p["b2"][0]
    return _layernorm(x1 + ff, p["g2"][0], p["beta2"][0])


def ref_forward(x, attention_mask, layer_params, cls_w, cls_b, num_heads):
    mask = attention_mask.astype(jnp.float32)
    h = x
    for p in layer_params:
        h = ref_layer(h, mask, p, num_heads)
    return h[:, 0, :] @ cls_w.T + cls_b[0]


# ----------------------------------------------------------------------------
# Deterministic parameter init (shapes from TransformerEncoderLayer.__init__)
# ----------------------------------------------------------------------------
def init_layer_params(key, D, H):
    ks = jax.random.split(key, 4)
    scale = 0.05
    return {
        "wqkv": scale * jax.random.normal(ks[0], (3 * D, D), jnp.float32),
        "bqkv": jnp.zeros((1, 3 * D), jnp.float32),
        "wo": scale * jax.random.normal(ks[1], (D, D), jnp.float32),
        "bo": jnp.zeros((1, D), jnp.float32),
        "g1": jnp.ones((1, D), jnp.float32),
        "beta1": jnp.zeros((1, D), jnp.float32),
        "w1": scale * jax.random.normal(ks[2], (H, D), jnp.float32),
        "b1": jnp.zeros((1, H), jnp.float32),
        "w2": scale * jax.random.normal(ks[3], (D, H), jnp.float32),
        "b2": jnp.zeros((1, D), jnp.float32),
        "g2": jnp.ones((1, D), jnp.float32),
        "beta2": jnp.zeros((1, D), jnp.float32),
    }


if __name__ == "__main__":
    # Small, module-consistent shapes
    B, S = 2, 8
    input_dim, num_heads, hidden_dim, num_layers = 32, 4, 64, 2
    num_classes = 2

    root = jax.random.PRNGKey(0)
    k_x, k_cls, *k_layers = jax.random.split(root, 2 + num_layers)

    x = jax.random.normal(k_x, (B, S, input_dim), jnp.float32)
    # attention_mask: 1 = attend, 0 = padded (batch 1 has two padded positions)
    attention_mask = jnp.ones((B, S), jnp.int32).at[1, S - 2:].set(0)

    layer_params = [init_layer_params(k, input_dim, hidden_dim) for k in k_layers]
    cls_w = 0.05 * jax.random.normal(k_cls, (num_classes, input_dim), jnp.float32)
    cls_b = jnp.zeros((1, num_classes), jnp.float32)

    # TODO(synk): dropout layers are identity here (eval mode), not implemented.
    logits = transformer_classifier_forward(
        x, attention_mask, layer_params, cls_w, cls_b, num_heads)
    logits = jax.block_until_ready(logits)

    expected = ref_forward(x, attention_mask, layer_params, cls_w, cls_b, num_heads)
    # bf16 matmul operands + approx softmax reciprocal vs f32 reference
    np.testing.assert_allclose(np.asarray(logits), np.asarray(expected),
                               rtol=2e-2, atol=2e-2)
    assert logits.shape == (B, num_classes)
    print("KERNEL_OK")
</pallas_src>

<mosaic_0001>
module attributes {stable_mosaic.version = 11 : i64} {
  func.func @_model_kernel(%arg0: memref<2x8x32xf32, #tpu.memory_space<vmem>>, %arg1: memref<2x8x8xf32, #tpu.memory_space<vmem>>, %arg2: memref<2x32x96xbf16, #tpu.memory_space<vmem>>, %arg3: memref<2x1x96xf32, #tpu.memory_space<vmem>>, %arg4: memref<2x32x32xbf16, #tpu.memory_space<vmem>>, %arg5: memref<2x1x32xf32, #tpu.memory_space<vmem>>, %arg6: memref<2x1x32xf32, #tpu.memory_space<vmem>>, %arg7: memref<2x1x32xf32, #tpu.memory_space<vmem>>, %arg8: memref<2x32x64xbf16, #tpu.memory_space<vmem>>, %arg9: memref<2x1x64xf32, #tpu.memory_space<vmem>>, %arg10: memref<2x64x32xbf16, #tpu.memory_space<vmem>>, %arg11: memref<2x1x32xf32, #tpu.memory_space<vmem>>, %arg12: memref<2x1x32xf32, #tpu.memory_space<vmem>>, %arg13: memref<2x1x32xf32, #tpu.memory_space<vmem>>, %arg14: memref<32x128xf32, #tpu.memory_space<vmem>>, %arg15: memref<1x128xf32, #tpu.memory_space<vmem>>, %arg16: memref<16x128xf32, #tpu.memory_space<vmem>>) attributes {dimension_semantics = [], scalar_prefetch = 0 : i64, scratch_operands = 0 : i64, tpu.core_type = #tpu.core_type<tc>} {
    %c0 = arith.constant 0 : index
    %c0_0 = arith.constant 0 : index
    %c0_1 = arith.constant 0 : index
    %0 = vector.load %arg1[%c0, %c0_0, %c0_1] : memref<2x8x8xf32, #tpu.memory_space<vmem>>, vector<2x8x8xf32>
    %c0_2 = arith.constant 0 : index
    %c0_3 = arith.constant 0 : index
    %c0_4 = arith.constant 0 : index
    %1 = vector.load %arg0[%c0_2, %c0_3, %c0_4] : memref<2x8x32xf32, #tpu.memory_space<vmem>>, vector<2x8x32xf32>
    %2 = vector.shape_cast %1 : vector<2x8x32xf32> to vector<16x32xf32>
    %3 = arith.truncf %2 : vector<16x32xf32> to vector<16x32xbf16>
    %c0_5 = arith.constant 0 : index
    %c0_6 = arith.constant 0 : index
    %c0_7 = arith.constant 0 : index
    %4 = vector.load %arg2[%c0_5, %c0_6, %c0_7] : memref<2x32x96xbf16, #tpu.memory_space<vmem>>, vector<1x32x96xbf16>
    %5 = vector.shape_cast %4 : vector<1x32x96xbf16> to vector<32x96xbf16>
    %cst = arith.constant dense<0.000000e+00> : vector<16x96xf32>
    %6 = tpu.matmul %3, %5, %cst {dimension_numbers = #tpu.dot_dimension_numbers<[1], [0], [0], [1], [0, 0, 1, 1], [], []>} : vector<16x32xbf16>, vector<32x96xbf16>, vector<16x96xf32> -> vector<16x96xf32>
    %c0_8 = arith.constant 0 : index
    %c0_9 = arith.constant 0 : index
    %c0_10 = arith.constant 0 : index
    %7 = vector.load %arg3[%c0_8, %c0_9, %c0_10] : memref<2x1x96xf32, #tpu.memory_space<vmem>>, vector<1x1x96xf32>
    %8 = vector.shape_cast %7 : vector<1x1x96xf32> to vector<1x96xf32>
    %9 = vector.broadcast %8 : vector<1x96xf32> to vector<16x96xf32>
    %10 = arith.addf %6, %9 : vector<16x96xf32>
    %11 = vector.shape_cast %10 : vector<16x96xf32> to vector<2x8x96xf32>
    %12 = vector.extract_strided_slice %11 {offsets = [0, 0, 0], sizes = [2, 8, 8], strides = [1, 1, 1]} : vector<2x8x96xf32> to vector<2x8x8xf32>
    %13 = arith.truncf %12 : vector<2x8x8xf32> to vector<2x8x8xbf16>
    %14 = vector.extract_strided_slice %11 {offsets = [0, 0, 32], sizes = [2, 8, 8], strides = [1, 1, 1]} : vector<2x8x96xf32> to vector<2x8x8xf32>
    %15 = arith.truncf %14 : vector<2x8x8xf32> to vector<2x8x8xbf16>
    %16 = vector.extract_strided_slice %11 {offsets = [0, 0, 64], sizes = [2, 8, 8], strides = [1, 1, 1]} : vector<2x8x96xf32> to vector<2x8x8xf32>
    %17 = arith.truncf %16 : vector<2x8x8xf32> to vector<2x8x8xbf16>
    "tpu.trace_start"() <{level = 10 : i32, message = "bqd,bkd->bqk"}> : () -> ()
    %cst_11 = arith.constant dense<0.000000e+00> : vector<2x8x8xf32>
    %18 = tpu.matmul %13, %15, %cst_11 {dimension_numbers = #tpu.dot_dimension_numbers<[2], [2], [1], [1], [0, 0, 0, 1, 1, 1], [0], [0]>} : vector<2x8x8xbf16>, vector<2x8x8xbf16>, vector<2x8x8xf32> -> vector<2x8x8xf32>
    "tpu.trace_stop"() : () -> ()
    %19 = arith.addf %18, %0 : vector<2x8x8xf32>
    %cst_12 = arith.constant dense<0xFF800000> : vector<2x8xf32>
    %20 = vector.multi_reduction <maximumf>, %19, %cst_12 [2] : vector<2x8x8xf32> to vector<2x8xf32>
    %21 = vector.shape_cast %20 : vector<2x8xf32> to vector<2x8x1xf32>
    %22 = vector.broadcast %21 : vector<2x8x1xf32> to vector<2x8x8xf32>
    %23 = arith.subf %19, %22 : vector<2x8x8xf32>
    %24 = math.exp %23 : vector<2x8x8xf32>
    %cst_13 = arith.constant dense<0.000000e+00> : vector<2x8xf32>
    %25 = vector.multi_reduction <add>, %24, %cst_13 [2] : vector<2x8x8xf32> to vector<2x8xf32>
    %26 = vector.shape_cast %25 : vector<2x8xf32> to vector<2x8x1xf32>
    %27 = tpu.reciprocal %26 {approx = true} : vector<2x8x1xf32> -> vector<2x8x1xf32>
    %28 = vector.broadcast %27 : vector<2x8x1xf32> to vector<2x8x8xf32>
    %29 = arith.mulf %24, %28 : vector<2x8x8xf32>
    %30 = arith.truncf %29 : vector<2x8x8xf32> to vector<2x8x8xbf16>
    "tpu.trace_start"() <{level = 10 : i32, message = "bqk,bkd->bqd"}> : () -> ()
    %cst_14 = arith.constant dense<0.000000e+00> : vector<2x8x8xf32>
    %31 = tpu.matmul %30, %17, %cst_14 {dimension_numbers = #tpu.dot_dimension_numbers<[2], [1], [1], [2], [0, 0, 0, 1, 1, 2], [0], [0]>} : vector<2x8x8xbf16>, vector<2x8x8xbf16>, vector<2x8x8xf32> -> vector<2x8x8xf32>
    "tpu.trace_stop"() : () -> ()
    %32 = vector.extract_strided_slice %11 {offsets = [0, 0, 8], sizes = [2, 8, 8], strides = [1, 1, 1]} : vector<2x8x96xf32> to vector<2x8x8xf32>
    %33 = arith.truncf %32 : vector<2x8x8xf32> to vector<2x8x8xbf16>
    %34 = vector.extract_strided_slice %11 {offsets = [0, 0, 40], sizes = [2, 8, 8], strides = [1, 1, 1]} : vector<2x8x96xf32> to vector<2x8x8xf32>
    %35 = arith.truncf %34 : vector<2x8x8xf32> to vector<2x8x8xbf16>
    %36 = vector.extract_strided_slice %11 {offsets = [0, 0, 72], sizes = [2, 8, 8], strides = [1, 1, 1]} : vector<2x8x96xf32> to vector<2x8x8xf32>
    %37 = arith.truncf %36 : vector<2x8x8xf32> to vector<2x8x8xbf16>
    "tpu.trace_start"() <{level = 10 : i32, message = "bqd,bkd->bqk"}> : () -> ()
    %cst_15 = arith.constant dense<0.000000e+00> : vector<2x8x8xf32>
    %38 = tpu.matmul %33, %35, %cst_15 {dimension_numbers = #tpu.dot_dimension_numbers<[2], [2], [1], [1], [0, 0, 0, 1, 1, 1], [0], [0]>} : vector<2x8x8xbf16>, vector<2x8x8xbf16>, vector<2x8x8xf32> -> vector<2x8x8xf32>
    "tpu.trace_stop"() : () -> ()
    %39 = arith.addf %38, %0 : vector<2x8x8xf32>
    %cst_16 = arith.constant dense<0xFF800000> : vector<2x8xf32>
    %40 = vector.multi_reduction <maximumf>, %39, %cst_16 [2] : vector<2x8x8xf32> to vector<2x8xf32>
    %41 = vector.shape_cast %40 : vector<2x8xf32> to vector<2x8x1xf32>
    %42 = vector.broadcast %41 : vector<2x8x1xf32> to vector<2x8x8xf32>
    %43 = arith.subf %39, %42 : vector<2x8x8xf32>
    %44 = math.exp %43 : vector<2x8x8xf32>
    %cst_17 = arith.constant dense<0.000000e+00> : vector<2x8xf32>
    %45 = vector.multi_reduction <add>, %44, %cst_17 [2] : vector<2x8x8xf32> to vector<2x8xf32>
    %46 = vector.shape_cast %45 : vector<2x8xf32> to vector<2x8x1xf32>
    %47 = tpu.reciprocal %46 {approx = true} : vector<2x8x1xf32> -> vector<2x8x1xf32>
    %48 = vector.broadcast %47 : vector<2x8x1xf32> to vector<2x8x8xf32>
    %49 = arith.mulf %44, %48 : vector<2x8x8xf32>
    %50 = arith.truncf %49 : vector<2x8x8xf32> to vector<2x8x8xbf16>
    "tpu.trace_start"() <{level = 10 : i32, message = "bqk,bkd->bqd"}> : () -> ()
    %cst_18 = arith.constant dense<0.000000e+00> : vector<2x8x8xf32>
    %51 = tpu.matmul %50, %37, %cst_18 {dimension_numbers = #tpu.dot_dimension_numbers<[2], [1], [1], [2], [0, 0, 0, 1, 1, 2], [0], [0]>} : vector<2x8x8xbf16>, vector<2x8x8xbf16>, vector<2x8x8xf32> -> vector<2x8x8xf32>
    "tpu.trace_stop"() : () -> ()
    %52 = vector.extract_strided_slice %11 {offsets = [0, 0, 16], sizes = [2, 8, 8], strides = [1, 1, 1]} : vector<2x8x96xf32> to vector<2x8x8xf32>
    %53 = arith.truncf %52 : vector<2x8x8xf32> to vector<2x8x8xbf16>
    %54 = vector.extract_strided_slice %11 {offsets = [0, 0, 48], sizes = [2, 8, 8], strides = [1, 1, 1]} : vector<2x8x96xf32> to vector<2x8x8xf32>
    %55 = arith.truncf %54 : vector<2x8x8xf32> to vector<2x8x8xbf16>
    %56 = vector.extract_strided_slice %11 {offsets = [0, 0, 80], sizes = [2, 8, 8], strides = [1, 1, 1]} : vector<2x8x96xf32> to vector<2x8x8xf32>
    %57 = arith.truncf %56 : vector<2x8x8xf32> to vector<2x8x8xbf16>
    "tpu.trace_start"() <{level = 10 : i32, message = "bqd,bkd->bqk"}> : () -> ()
    %cst_19 = arith.constant dense<0.000000e+00> : vector<2x8x8xf32>
    %58 = tpu.matmul %53, %55, %cst_19 {dimension_numbers = #tpu.dot_dimension_numbers<[2], [2], [1], [1], [0, 0, 0, 1, 1, 1], [0], [0]>} : vector<2x8x8xbf16>, vector<2x8x8xbf16>, vector<2x8x8xf32> -> vector<2x8x8xf32>
    "tpu.trace_stop"() : () -> ()
    %59 = arith.addf %58, %0 : vector<2x8x8xf32>
    %cst_20 = arith.constant dense<0xFF800000> : vector<2x8xf32>
    %60 = vector.multi_reduction <maximumf>, %59, %cst_20 [2] : vector<2x8x8xf32> to vector<2x8xf32>
    %61 = vector.shape_cast %60 : vector<2x8xf32> to vector<2x8x1xf32>
    %62 = vector.broadcast %61 : vector<2x8x1xf32> to vector<2x8x8xf32>
    %63 = arith.subf %59, %62 : vector<2x8x8xf32>
    %64 = math.exp %63 : vector<2x8x8xf32>
    %cst_21 = arith.constant dense<0.000000e+00> : vector<2x8xf32>
    %65 = vector.multi_reduction <add>, %64, %cst_21 [2] : vector<2x8x8xf32> to vector<2x8xf32>
    %66 = vector.shape_cast %65 : vector<2x8xf32> to vector<2x8x1xf32>
    %67 = tpu.reciprocal %66 {approx = true} : vector<2x8x1xf32> -> vector<2x8x1xf32>
    %68 = vector.broadcast %67 : vector<2x8x1xf32> to vector<2x8x8xf32>
    %69 = arith.mulf %64, %68 : vector<2x8x8xf32>
    %70 = arith.truncf %69 : vector<2x8x8xf32> to vector<2x8x8xbf16>
    "tpu.trace_start"() <{level = 10 : i32, message = "bqk,bkd->bqd"}> : () -> ()
    %cst_22 = arith.constant dense<0.000000e+00> : vector<2x8x8xf32>
    %71 = tpu.matmul %70, %57, %cst_22 {dimension_numbers = #tpu.dot_dimension_numbers<[2], [1], [1], [2], [0, 0, 0, 1, 1, 2], [0], [0]>} : vector<2x8x8xbf16>, vector<2x8x8xbf16>, vector<2x8x8xf32> -> vector<2x8x8xf32>
    "tpu.trace_stop"() : () -> ()
    %72 = vector.extract_strided_slice %11 {offsets = [0, 0, 24], sizes = [2, 8, 8], strides = [1, 1, 1]} : vector<2x8x96xf32> to vector<2x8x8xf32>
    %73 = arith.truncf %72 : vector<2x8x8xf32> to vector<2x8x8xbf16>
    %74 = vector.extract_strided_slice %11 {offsets = [0, 0, 56], sizes = [2, 8, 8], strides = [1, 1, 1]} : vector<2x8x96xf32> to vector<2x8x8xf32>
    %75 = arith.truncf %74 : vector<2x8x8xf32> to vector<2x8x8xbf16>
    %76 = vector.extract_strided_slice %11 {offsets = [0, 0, 88], sizes = [2, 8, 8], strides = [1, 1, 1]} : vector<2x8x96xf32> to vector<2x8x8xf32>
    %77 = arith.truncf %76 : vector<2x8x8xf32> to vector<2x8x8xbf16>
    "tpu.trace_start"() <{level = 10 : i32, message = "bqd,bkd->bqk"}> : () -> ()
    %cst_23 = arith.constant dense<0.000000e+00> : vector<2x8x8xf32>
    %78 = tpu.matmul %73, %75, %cst_23 {dimension_numbers = #tpu.dot_dimension_numbers<[2], [2], [1], [1], [0, 0, 0, 1, 1, 1], [0], [0]>} : vector<2x8x8xbf16>, vector<2x8x8xbf16>, vector<2x8x8xf32> -> vector<2x8x8xf32>
    "tpu.trace_stop"() : () -> ()
    %79 = arith.addf %78, %0 : vector<2x8x8xf32>
    %cst_24 = arith.constant dense<0xFF800000> : vector<2x8xf32>
    %80 = vector.multi_reduction <maximumf>, %79, %cst_24 [2] : vector<2x8x8xf32> to vector<2x8xf32>
    %81 = vector.shape_cast %80 : vector<2x8xf32> to vector<2x8x1xf32>
    %82 = vector.broadcast %81 : vector<2x8x1xf32> to vector<2x8x8xf32>
    %83 = arith.subf %79, %82 : vector<2x8x8xf32>
    %84 = math.exp %83 : vector<2x8x8xf32>
    %cst_25 = arith.constant dense<0.000000e+00> : vector<2x8xf32>
    %85 = vector.multi_reduction <add>, %84, %cst_25 [2] : vector<2x8x8xf32> to vector<2x8xf32>
    %86 = vector.shape_cast %85 : vector<2x8xf32> to vector<2x8x1xf32>
    %87 = tpu.reciprocal %86 {approx = true} : vector<2x8x1xf32> -> vector<2x8x1xf32>
    %88 = vector.broadcast %87 : vector<2x8x1xf32> to vector<2x8x8xf32>
    %89 = arith.mulf %84, %88 : vector<2x8x8xf32>
    %90 = arith.truncf %89 : vector<2x8x8xf32> to vector<2x8x8xbf16>
    "tpu.trace_start"() <{level = 10 : i32, message = "bqk,bkd->bqd"}> : () -> ()
    %cst_26 = arith.constant dense<0.000000e+00> : vector<2x8x8xf32>
    %91 = tpu.matmul %90, %77, %cst_26 {dimension_numbers = #tpu.dot_dimension_numbers<[2], [1], [1], [2], [0, 0, 0, 1, 1, 2], [0], [0]>} : vector<2x8x8xbf16>, vector<2x8x8xbf16>, vector<2x8x8xf32> -> vector<2x8x8xf32>
    "tpu.trace_stop"() : () -> ()
    %92 = tpu.concatenate %31, %51, %71, %91 in 2 : vector<2x8x8xf32>, vector<2x8x8xf32>, vector<2x8x8xf32>, vector<2x8x8xf32> -> vector<2x8x32xf32>
    %93 = vector.shape_cast %92 : vector<2x8x32xf32> to vector<16x32xf32>
    %94 = arith.truncf %93 : vector<16x32xf32> to vector<16x32xbf16>
    %c0_27 = arith.constant 0 : index
    %c0_28 = arith.constant 0 : index
    %c0_29 = arith.constant 0 : index
    %95 = vector.load %arg4[%c0_27, %c0_28, %c0_29] : memref<2x32x32xbf16, #tpu.memory_space<vmem>>, vector<1x32x32xbf16>
    %96 = vector.shape_cast %95 : vector<1x32x32xbf16> to vector<32x32xbf16>
    %cst_30 = arith.constant dense<0.000000e+00> : vector<16x32xf32>
    %97 = tpu.matmul %94, %96, %cst_30 {dimension_numbers = #tpu.dot_dimension_numbers<[1], [0], [0], [1], [0, 0, 1, 1], [], []>} : vector<16x32xbf16>, vector<32x32xbf16>, vector<16x32xf32> -> vector<16x32xf32>
    %c0_31 = arith.constant 0 : index
    %c0_32 = arith.constant 0 : index
    %c0_33 = arith.constant 0 : index
    %98 = vector.load %arg5[%c0_31, %c0_32, %c0_33] : memref<2x1x32xf32, #tpu.memory_space<vmem>>, vector<1x1x32xf32>
    %99 = vector.shape_cast %98 : vector<1x1x32xf32> to vector<1x32xf32>
    %100 = vector.broadcast %99 : vector<1x32xf32> to vector<16x32xf32>
    %101 = arith.addf %97, %100 : vector<16x32xf32>
    %102 = arith.addf %2, %101 : vector<16x32xf32>
    %cst_34 = arith.constant dense<0.000000e+00> : vector<16xf32>
    %103 = vector.multi_reduction <add>, %102, %cst_34 [1] : vector<16x32xf32> to vector<16xf32>
    %104 = vector.shape_cast %103 : vector<16xf32> to vector<16x1xf32>
    %cst_35 = arith.constant 3.200000e+01 : f32
    %105 = vector.broadcast %cst_35 : f32 to vector<16x1xf32>
    %106 = arith.divf %104, %105 : vector<16x1xf32>
    %107 = vector.broadcast %106 : vector<16x1xf32> to vector<16x32xf32>
    %108 = arith.subf %102, %107 : vector<16x32xf32>
    %109 = arith.mulf %108, %108 : vector<16x32xf32>
    %cst_36 = arith.constant dense<0.000000e+00> : vector<16xf32>
    %110 = vector.multi_reduction <add>, %109, %cst_36 [1] : vector<16x32xf32> to vector<16xf32>
    %111 = vector.shape_cast %110 : vector<16xf32> to vector<16x1xf32>
    %cst_37 = arith.constant 3.200000e+01 : f32
    %112 = vector.broadcast %cst_37 : f32 to vector<16x1xf32>
    %113 = arith.divf %111, %112 : vector<16x1xf32>
    %114 = vector.broadcast %106 : vector<16x1xf32> to vector<16x32xf32>
    %115 = arith.subf %102, %114 : vector<16x32xf32>
    %cst_38 = arith.constant 9.99999974E-6 : f32
    %116 = vector.broadcast %cst_38 : f32 to vector<16x1xf32>
    %117 = arith.addf %113, %116 : vector<16x1xf32>
    %118 = math.rsqrt %117 : vector<16x1xf32>
    %119 = vector.broadcast %118 : vector<16x1xf32> to vector<16x32xf32>
    %120 = arith.mulf %115, %119 : vector<16x32xf32>
    %c0_39 = arith.constant 0 : index
    %c0_40 = arith.constant 0 : index
    %c0_41 = arith.constant 0 : index
    %121 = vector.load %arg6[%c0_39, %c0_40, %c0_41] : memref<2x1x32xf32, #tpu.memory_space<vmem>>, vector<1x1x32xf32>
    %122 = vector.shape_cast %121 : vector<1x1x32xf32> to vector<1x32xf32>
    %123 = vector.broadcast %122 : vector<1x32xf32> to vector<16x32xf32>
    %124 = arith.mulf %120, %123 : vector<16x32xf32>
    %c0_42 = arith.constant 0 : index
    %c0_43 = arith.constant 0 : index
    %c0_44 = arith.constant 0 : index
    %125 = vector.load %arg7[%c0_42, %c0_43, %c0_44] : memref<2x1x32xf32, #tpu.memory_space<vmem>>, vector<1x1x32xf32>
    %126 = vector.shape_cast %125 : vector<1x1x32xf32> to vector<1x32xf32>
    %127 = vector.broadcast %126 : vector<1x32xf32> to vector<16x32xf32>
    %128 = arith.addf %124, %127 : vector<16x32xf32>
    %129 = arith.truncf %128 : vector<16x32xf32> to vector<16x32xbf16>
    %c0_45 = arith.constant 0 : index
    %c0_46 = arith.constant 0 : index
    %c0_47 = arith.constant 0 : index
    %130 = vector.load %arg8[%c0_45, %c0_46, %c0_47] : memref<2x32x64xbf16, #tpu.memory_space<vmem>>, vector<1x32x64xbf16>
    %131 = vector.shape_cast %130 : vector<1x32x64xbf16> to vector<32x64xbf16>
    %cst_48 = arith.constant dense<0.000000e+00> : vector<16x64xf32>
    %132 = tpu.matmul %129, %131, %cst_48 {dimension_numbers = #tpu.dot_dimension_numbers<[1], [0], [0], [1], [0, 0, 1, 1], [], []>} : vector<16x32xbf16>, vector<32x64xbf16>, vector<16x64xf32> -> vector<16x64xf32>
    %c0_49 = arith.constant 0 : index
    %c0_50 = arith.constant 0 : index
    %c0_51 = arith.constant 0 : index
    %133 = vector.load %arg9[%c0_49, %c0_50, %c0_51] : memref<2x1x64xf32, #tpu.memory_space<vmem>>, vector<1x1x64xf32>
    %134 = vector.shape_cast %133 : vector<1x1x64xf32> to vector<1x64xf32>
    %135 = vector.broadcast %134 : vector<1x64xf32> to vector<16x64xf32>
    %136 = arith.addf %132, %135 : vector<16x64xf32>
    %cst_52 = arith.constant 0.000000e+00 : f32
    %137 = vector.broadcast %cst_52 : f32 to vector<16x64xf32>
    %138 = arith.maximumf %136, %137 : vector<16x64xf32>
    %139 = arith.truncf %138 : vector<16x64xf32> to vector<16x64xbf16>
    %c0_53 = arith.constant 0 : index
    %c0_54 = arith.constant 0 : index
    %c0_55 = arith.constant 0 : index
    %140 = vector.load %arg10[%c0_53, %c0_54, %c0_55] : memref<2x64x32xbf16, #tpu.memory_space<vmem>>, vector<1x64x32xbf16>
    %141 = vector.shape_cast %140 : vector<1x64x32xbf16> to vector<64x32xbf16>
    %cst_56 = arith.constant dense<0.000000e+00> : vector<16x32xf32>
    %142 = tpu.matmul %139, %141, %cst_56 {dimension_numbers = #tpu.dot_dimension_numbers<[1], [0], [0], [1], [0, 0, 1, 1], [], []>} : vector<16x64xbf16>, vector<64x32xbf16>, vector<16x32xf32> -> vector<16x32xf32>
    %c0_57 = arith.constant 0 : index
    %c0_58 = arith.constant 0 : index
    %c0_59 = arith.constant 0 : index
    %143 = vector.load %arg11[%c0_57, %c0_58, %c0_59] : memref<2x1x32xf32, #tpu.memory_space<vmem>>, vector<1x1x32xf32>
    %144 = vector.shape_cast %143 : vector<1x1x32xf32> to vector<1x32xf32>
    %145 = vector.broadcast %144 : vector<1x32xf32> to vector<16x32xf32>
    %146 = arith.addf %142, %145 : vector<16x32xf32>
    %147 = arith.addf %128, %146 : vector<16x32xf32>
    %cst_60 = arith.constant dense<0.000000e+00> : vector<16xf32>
    %148 = vector.multi_reduction <add>, %147, %cst_60 [1] : vector<16x32xf32> to vector<16xf32>
    %149 = vector.shape_cast %148 : vector<16xf32> to vector<16x1xf32>
    %cst_61 = arith.constant 3.200000e+01 : f32
    %150 = vector.broadcast %cst_61 : f32 to vector<16x1xf32>
    %151 = arith.divf %149, %150 : vector<16x1xf32>
    %152 = vector.broadcast %151 : vector<16x1xf32> to vector<16x32xf32>
    %153 = arith.subf %147, %152 : vector<16x32xf32>
    %154 = arith.mulf %153, %153 : vector<16x32xf32>
    %cst_62 = arith.constant dense<0.000000e+00> : vector<16xf32>
    %155 = vector.multi_reduction <add>, %154, %cst_62 [1] : vector<16x32xf32> to vector<16xf32>
    %156 = vector.shape_cast %155 : vector<16xf32> to vector<16x1xf32>
    %cst_63 = arith.constant 3.200000e+01 : f32
    %157 = vector.broadcast %cst_63 : f32 to vector<16x1xf32>
    %158 = arith.divf %156, %157 : vector<16x1xf32>
    %159 = vector.broadcast %151 : vector<16x1xf32> to vector<16x32xf32>
    %160 = arith.subf %147, %159 : vector<16x32xf32>
    %cst_64 = arith.constant 9.99999974E-6 : f32
    %161 = vector.broadcast %cst_64 : f32 to vector<16x1xf32>
    %162 = arith.addf %158, %161 : vector<16x1xf32>
    %163 = math.rsqrt %162 : vector<16x1xf32>
    %164 = vector.broadcast %163 : vector<16x1xf32> to vector<16x32xf32>
    %165 = arith.mulf %160, %164 : vector<16x32xf32>
    %c0_65 = arith.constant 0 : index
    %c0_66 = arith.constant 0 : index
    %c0_67 = arith.constant 0 : index
    %166 = vector.load %arg12[%c0_65, %c0_66, %c0_67] : memref<2x1x32xf32, #tpu.memory_space<vmem>>, vector<1x1x32xf32>
    %167 = vector.shape_cast %166 : vector<1x1x32xf32> to vector<1x32xf32>
    %168 = vector.broadcast %167 : vector<1x32xf32> to vector<16x32xf32>
    %169 = arith.mulf %165, %168 : vector<16x32xf32>
    %c0_68 = arith.constant 0 : index
    %c0_69 = arith.constant 0 : index
    %c0_70 = arith.constant 0 : index
    %170 = vector.load %arg13[%c0_68, %c0_69, %c0_70] : memref<2x1x32xf32, #tpu.memory_space<vmem>>, vector<1x1x32xf32>
    %171 = vector.shape_cast %170 : vector<1x1x32xf32> to vector<1x32xf32>
    %172 = vector.broadcast %171 : vector<1x32xf32> to vector<16x32xf32>
    %173 = arith.addf %169, %172 : vector<16x32xf32>
    %174 = arith.truncf %173 : vector<16x32xf32> to vector<16x32xbf16>
    %c1 = arith.constant 1 : index
    %c0_71 = arith.constant 0 : index
    %c0_72 = arith.constant 0 : index
    %175 = vector.load %arg2[%c1, %c0_71, %c0_72] : memref<2x32x96xbf16, #tpu.memory_space<vmem>>, vector<1x32x96xbf16>
    %176 = vector.shape_cast %175 : vector<1x32x96xbf16> to vector<32x96xbf16>
    %cst_73 = arith.constant dense<0.000000e+00> : vector<16x96xf32>
    %177 = tpu.matmul %174, %176, %cst_73 {dimension_numbers = #tpu.dot_dimension_numbers<[1], [0], [0], [1], [0, 0, 1, 1], [], []>} : vector<16x32xbf16>, vector<32x96xbf16>, vector<16x96xf32> -> vector<16x96xf32>
    %c1_74 = arith.constant 1 : index
    %c0_75 = arith.constant 0 : index
    %c0_76 = arith.constant 0 : index
    %178 = vector.load %arg3[%c1_74, %c0_75, %c0_76] : memref<2x1x96xf32, #tpu.memory_space<vmem>>, vector<1x1x96xf32>
    %179 = vector.shape_cast %178 : vector<1x1x96xf32> to vector<1x96xf32>
    %180 = vector.broadcast %179 : vector<1x96xf32> to vector<16x96xf32>
    %181 = arith.addf %177, %180 : vector<16x96xf32>
    %182 = vector.shape_cast %181 : vector<16x96xf32> to vector<2x8x96xf32>
    %183 = vector.extract_strided_slice %182 {offsets = [0, 0, 0], sizes = [2, 8, 8], strides = [1, 1, 1]} : vector<2x8x96xf32> to vector<2x8x8xf32>
    %184 = arith.truncf %183 : vector<2x8x8xf32> to vector<2x8x8xbf16>
    %185 = vector.extract_strided_slice %182 {offsets = [0, 0, 32], sizes = [2, 8, 8], strides = [1, 1, 1]} : vector<2x8x96xf32> to vector<2x8x8xf32>
    %186 = arith.truncf %185 : vector<2x8x8xf32> to vector<2x8x8xbf16>
    %187 = vector.extract_strided_slice %182 {offsets = [0, 0, 64], sizes = [2, 8, 8], strides = [1, 1, 1]} : vector<2x8x96xf32> to vector<2x8x8xf32>
    %188 = arith.truncf %187 : vector<2x8x8xf32> to vector<2x8x8xbf16>
    "tpu.trace_start"() <{level = 10 : i32, message = "bqd,bkd->bqk"}> : () -> ()
    %cst_77 = arith.constant dense<0.000000e+00> : vector<2x8x8xf32>
    %189 = tpu.matmul %184, %186, %cst_77 {dimension_numbers = #tpu.dot_dimension_numbers<[2], [2], [1], [1], [0, 0, 0, 1, 1, 1], [0], [0]>} : vector<2x8x8xbf16>, vector<2x8x8xbf16>, vector<2x8x8xf32> -> vector<2x8x8xf32>
    "tpu.trace_stop"() : () -> ()
    %190 = arith.addf %189, %0 : vector<2x8x8xf32>
    %cst_78 = arith.constant dense<0xFF800000> : vector<2x8xf32>
    %191 = vector.multi_reduction <maximumf>, %190, %cst_78 [2] : vector<2x8x8xf32> to vector<2x8xf32>
    %192 = vector.shape_cast %191 : vector<2x8xf32> to vector<2x8x1xf32>
    %193 = vector.broadcast %192 : vector<2x8x1xf32> to vector<2x8x8xf32>
    %194 = arith.subf %190, %193 : vector<2x8x8xf32>
    %195 = math.exp %194 : vector<2x8x8xf32>
    %cst_79 = arith.constant dense<0.000000e+00> : vector<2x8xf32>
    %196 = vector.multi_reduction <add>, %195, %cst_79 [2] : vector<2x8x8xf32> to vector<2x8xf32>
    %197 = vector.shape_cast %196 : vector<2x8xf32> to vector<2x8x1xf32>
    %198 = tpu.reciprocal %197 {approx = true} : vector<2x8x1xf32> -> vector<2x8x1xf32>
    %199 = vector.broadcast %198 : vector<2x8x1xf32> to vector<2x8x8xf32>
    %200 = arith.mulf %195, %199 : vector<2x8x8xf32>
    %201 = arith.truncf %200 : vector<2x8x8xf32> to vector<2x8x8xbf16>
    "tpu.trace_start"() <{level = 10 : i32, message = "bqk,bkd->bqd"}> : () -> ()
    %cst_80 = arith.constant dense<0.000000e+00> : vector<2x8x8xf32>
    %202 = tpu.matmul %201, %188, %cst_80 {dimension_numbers = #tpu.dot_dimension_numbers<[2], [1], [1], [2], [0, 0, 0, 1, 1, 2], [0], [0]>} : vector<2x8x8xbf16>, vector<2x8x8xbf16>, vector<2x8x8xf32> -> vector<2x8x8xf32>
    "tpu.trace_stop"() : () -> ()
    %203 = vector.extract_strided_slice %182 {offsets = [0, 0, 8], sizes = [2, 8, 8], strides = [1, 1, 1]} : vector<2x8x96xf32> to vector<2x8x8xf32>
    %204 = arith.truncf %203 : vector<2x8x8xf32> to vector<2x8x8xbf16>
    %205 = vector.extract_strided_slice %182 {offsets = [0, 0, 40], sizes = [2, 8, 8], strides = [1, 1, 1]} : vector<2x8x96xf32> to vector<2x8x8xf32>
    %206 = arith.truncf %205 : vector<2x8x8xf32> to vector<2x8x8xbf16>
    %207 = vector.extract_strided_slice %182 {offsets = [0, 0, 72], sizes = [2, 8, 8], strides = [1, 1, 1]} : vector<2x8x96xf32> to vector<2x8x8xf32>
    %208 = arith.truncf %207 : vector<2x8x8xf32> to vector<2x8x8xbf16>
    "tpu.trace_start"() <{level = 10 : i32, message = "bqd,bkd->bqk"}> : () -> ()
    %cst_81 = arith.constant dense<0.000000e+00> : vector<2x8x8xf32>
    %209 = tpu.matmul %204, %206, %cst_81 {dimension_numbers = #tpu.dot_dimension_numbers<[2], [2], [1], [1], [0, 0, 0, 1, 1, 1], [0], [0]>} : vector<2x8x8xbf16>, vector<2x8x8xbf16>, vector<2x8x8xf32> -> vector<2x8x8xf32>
    "tpu.trace_stop"() : () -> ()
    %210 = arith.addf %209, %0 : vector<2x8x8xf32>
    %cst_82 = arith.constant dense<0xFF800000> : vector<2x8xf32>
    %211 = vector.multi_reduction <maximumf>, %210, %cst_82 [2] : vector<2x8x8xf32> to vector<2x8xf32>
    %212 = vector.shape_cast %211 : vector<2x8xf32> to vector<2x8x1xf32>
    %213 = vector.broadcast %212 : vector<2x8x1xf32> to vector<2x8x8xf32>
    %214 = arith.subf %210, %213 : vector<2x8x8xf32>
    %215 = math.exp %214 : vector<2x8x8xf32>
    %cst_83 = arith.constant dense<0.000000e+00> : vector<2x8xf32>
    %216 = vector.multi_reduction <add>, %215, %cst_83 [2] : vector<2x8x8xf32> to vector<2x8xf32>
    %217 = vector.shape_cast %216 : vector<2x8xf32> to vector<2x8x1xf32>
    %218 = tpu.reciprocal %217 {approx = true} : vector<2x8x1xf32> -> vector<2x8x1xf32>
    %219 = vector.broadcast %218 : vector<2x8x1xf32> to vector<2x8x8xf32>
    %220 = arith.mulf %215, %219 : vector<2x8x8xf32>
    %221 = arith.truncf %220 : vector<2x8x8xf32> to vector<2x8x8xbf16>
    "tpu.trace_start"() <{level = 10 : i32, message = "bqk,bkd->bqd"}> : () -> ()
    %cst_84 = arith.constant dense<0.000000e+00> : vector<2x8x8xf32>
    %222 = tpu.matmul %221, %208, %cst_84 {dimension_numbers = #tpu.dot_dimension_numbers<[2], [1], [1], [2], [0, 0, 0, 1, 1, 2], [0], [0]>} : vector<2x8x8xbf16>, vector<2x8x8xbf16>, vector<2x8x8xf32> -> vector<2x8x8xf32>
    "tpu.trace_stop"() : () -> ()
    %223 = vector.extract_strided_slice %182 {offsets = [0, 0, 16], sizes = [2, 8, 8], strides = [1, 1, 1]} : vector<2x8x96xf32> to vector<2x8x8xf32>
    %224 = arith.truncf %223 : vector<2x8x8xf32> to vector<2x8x8xbf16>
    %225 = vector.extract_strided_slice %182 {offsets = [0, 0, 48], sizes = [2, 8, 8], strides = [1, 1, 1]} : vector<2x8x96xf32> to vector<2x8x8xf32>
    %226 = arith.truncf %225 : vector<2x8x8xf32> to vector<2x8x8xbf16>
    %227 = vector.extract_strided_slice %182 {offsets = [0, 0, 80], sizes = [2, 8, 8], strides = [1, 1, 1]} : vector<2x8x96xf32> to vector<2x8x8xf32>
    %228 = arith.truncf %227 : vector<2x8x8xf32> to vector<2x8x8xbf16>
    "tpu.trace_start"() <{level = 10 : i32, message = "bqd,bkd->bqk"}> : () -> ()
    %cst_85 = arith.constant dense<0.000000e+00> : vector<2x8x8xf32>
    %229 = tpu.matmul %224, %226, %cst_85 {dimension_numbers = #tpu.dot_dimension_numbers<[2], [2], [1], [1], [0, 0, 0, 1, 1, 1], [0], [0]>} : vector<2x8x8xbf16>, vector<2x8x8xbf16>, vector<2x8x8xf32> -> vector<2x8x8xf32>
    "tpu.trace_stop"() : () -> ()
    %230 = arith.addf %229, %0 : vector<2x8x8xf32>
    %cst_86 = arith.constant dense<0xFF800000> : vector<2x8xf32>
    %231 = vector.multi_reduction <maximumf>, %230, %cst_86 [2] : vector<2x8x8xf32> to vector<2x8xf32>
    %232 = vector.shape_cast %231 : vector<2x8xf32> to vector<2x8x1xf32>
    %233 = vector.broadcast %232 : vector<2x8x1xf32> to vector<2x8x8xf32>
    %234 = arith.subf %230, %233 : vector<2x8x8xf32>
    %235 = math.exp %234 : vector<2x8x8xf32>
    %cst_87 = arith.constant dense<0.000000e+00> : vector<2x8xf32>
    %236 = vector.multi_reduction <add>, %235, %cst_87 [2] : vector<2x8x8xf32> to vector<2x8xf32>
    %237 = vector.shape_cast %236 : vector<2x8xf32> to vector<2x8x1xf32>
    %238 = tpu.reciprocal %237 {approx = true} : vector<2x8x1xf32> -> vector<2x8x1xf32>
    %239 = vector.broadcast %238 : vector<2x8x1xf32> to vector<2x8x8xf32>
    %240 = arith.mulf %235, %239 : vector<2x8x8xf32>
    %241 = arith.truncf %240 : vector<2x8x8xf32> to vector<2x8x8xbf16>
    "tpu.trace_start"() <{level = 10 : i32, message = "bqk,bkd->bqd"}> : () -> ()
    %cst_88 = arith.constant dense<0.000000e+00> : vector<2x8x8xf32>
    %242 = tpu.matmul %241, %228, %cst_88 {dimension_numbers = #tpu.dot_dimension_numbers<[2], [1], [1], [2], [0, 0, 0, 1, 1, 2], [0], [0]>} : vector<2x8x8xbf16>, vector<2x8x8xbf16>, vector<2x8x8xf32> -> vector<2x8x8xf32>
    "tpu.trace_stop"() : () -> ()
    %243 = vector.extract_strided_slice %182 {offsets = [0, 0, 24], sizes = [2, 8, 8], strides = [1, 1, 1]} : vector<2x8x96xf32> to vector<2x8x8xf32>
    %244 = arith.truncf %243 : vector<2x8x8xf32> to vector<2x8x8xbf16>
    %245 = vector.extract_strided_slice %182 {offsets = [0, 0, 56], sizes = [2, 8, 8], strides = [1, 1, 1]} : vector<2x8x96xf32> to vector<2x8x8xf32>
    %246 = arith.truncf %245 : vector<2x8x8xf32> to vector<2x8x8xbf16>
    %247 = vector.extract_strided_slice %182 {offsets = [0, 0, 88], sizes = [2, 8, 8], strides = [1, 1, 1]} : vector<2x8x96xf32> to vector<2x8x8xf32>
    %248 = arith.truncf %247 : vector<2x8x8xf32> to vector<2x8x8xbf16>
    "tpu.trace_start"() <{level = 10 : i32, message = "bqd,bkd->bqk"}> : () -> ()
    %cst_89 = arith.constant dense<0.000000e+00> : vector<2x8x8xf32>
    %249 = tpu.matmul %244, %246, %cst_89 {dimension_numbers = #tpu.dot_dimension_numbers<[2], [2], [1], [1], [0, 0, 0, 1, 1, 1], [0], [0]>} : vector<2x8x8xbf16>, vector<2x8x8xbf16>, vector<2x8x8xf32> -> vector<2x8x8xf32>
    "tpu.trace_stop"() : () -> ()
    %250 = arith.addf %249, %0 : vector<2x8x8xf32>
    %cst_90 = arith.constant dense<0xFF800000> : vector<2x8xf32>
    %251 = vector.multi_reduction <maximumf>, %250, %cst_90 [2] : vector<2x8x8xf32> to vector<2x8xf32>
    %252 = vector.shape_cast %251 : vector<2x8xf32> to vector<2x8x1xf32>
    %253 = vector.broadcast %252 : vector<2x8x1xf32> to vector<2x8x8xf32>
    %254 = arith.subf %250, %253 : vector<2x8x8xf32>
    %255 = math.exp %254 : vector<2x8x8xf32>
    %cst_91 = arith.constant dense<0.000000e+00> : vector<2x8xf32>
    %256 = vector.multi_reduction <add>, %255, %cst_91 [2] : vector<2x8x8xf32> to vector<2x8xf32>
    %257 = vector.shape_cast %256 : vector<2x8xf32> to vector<2x8x1xf32>
    %258 = tpu.reciprocal %257 {approx = true} : vector<2x8x1xf32> -> vector<2x8x1xf32>
    %259 = vector.broadcast %258 : vector<2x8x1xf32> to vector<2x8x8xf32>
    %260 = arith.mulf %255, %259 : vector<2x8x8xf32>
    %261 = arith.truncf %260 : vector<2x8x8xf32> to vector<2x8x8xbf16>
    "tpu.trace_start"() <{level = 10 : i32, message = "bqk,bkd->bqd"}> : () -> ()
    %cst_92 = arith.constant dense<0.000000e+00> : vector<2x8x8xf32>
    %262 = tpu.matmul %261, %248, %cst_92 {dimension_numbers = #tpu.dot_dimension_numbers<[2], [1], [1], [2], [0, 0, 0, 1, 1, 2], [0], [0]>} : vector<2x8x8xbf16>, vector<2x8x8xbf16>, vector<2x8x8xf32> -> vector<2x8x8xf32>
    "tpu.trace_stop"() : () -> ()
    %263 = tpu.concatenate %202, %222, %242, %262 in 2 : vector<2x8x8xf32>, vector<2x8x8xf32>, vector<2x8x8xf32>, vector<2x8x8xf32> -> vector<2x8x32xf32>
    %264 = vector.shape_cast %263 : vector<2x8x32xf32> to vector<16x32xf32>
    %265 = arith.truncf %264 : vector<16x32xf32> to vector<16x32xbf16>
    %c1_93 = arith.constant 1 : index
    %c0_94 = arith.constant 0 : index
    %c0_95 = arith.constant 0 : index
    %266 = vector.load %arg4[%c1_93, %c0_94, %c0_95] : memref<2x32x32xbf16, #tpu.memory_space<vmem>>, vector<1x32x32xbf16>
    %267 = vector.shape_cast %266 : vector<1x32x32xbf16> to vector<32x32xbf16>
    %cst_96 = arith.constant dense<0.000000e+00> : vector<16x32xf32>
    %268 = tpu.matmul %265, %267, %cst_96 {dimension_numbers = #tpu.dot_dimension_numbers<[1], [0], [0], [1], [0, 0, 1, 1], [], []>} : vector<16x32xbf16>, vector<32x32xbf16>, vector<16x32xf32> -> vector<16x32xf32>
    %c1_97 = arith.constant 1 : index
    %c0_98 = arith.constant 0 : index
    %c0_99 = arith.constant 0 : index
    %269 = vector.load %arg5[%c1_97, %c0_98, %c0_99] : memref<2x1x32xf32, #tpu.memory_space<vmem>>, vector<1x1x32xf32>
    %270 = vector.shape_cast %269 : vector<1x1x32xf32> to vector<1x32xf32>
    %271 = vector.broadcast %270 : vector<1x32xf32> to vector<16x32xf32>
    %272 = arith.addf %268, %271 : vector<16x32xf32>
    %273 = arith.addf %173, %272 : vector<16x32xf32>
    %cst_100 = arith.constant dense<0.000000e+00> : vector<16xf32>
    %274 = vector.multi_reduction <add>, %273, %cst_100 [1] : vector<16x32xf32> to vector<16xf32>
    %275 = vector.shape_cast %274 : vector<16xf32> to vector<16x1xf32>
    %cst_101 = arith.constant 3.200000e+01 : f32
    %276 = vector.broadcast %cst_101 : f32 to vector<16x1xf32>
    %277 = arith.divf %275, %276 : vector<16x1xf32>
    %278 = vector.broadcast %277 : vector<16x1xf32> to vector<16x32xf32>
    %279 = arith.subf %273, %278 : vector<16x32xf32>
    %280 = arith.mulf %279, %279 : vector<16x32xf32>
    %cst_102 = arith.constant dense<0.000000e+00> : vector<16xf32>
    %281 = vector.multi_reduction <add>, %280, %cst_102 [1] : vector<16x32xf32> to vector<16xf32>
    %282 = vector.shape_cast %281 : vector<16xf32> to vector<16x1xf32>
    %cst_103 = arith.constant 3.200000e+01 : f32
    %283 = vector.broadcast %cst_103 : f32 to vector<16x1xf32>
    %284 = arith.divf %282, %283 : vector<16x1xf32>
    %285 = vector.broadcast %277 : vector<16x1xf32> to vector<16x32xf32>
    %286 = arith.subf %273, %285 : vector<16x32xf32>
    %cst_104 = arith.constant 9.99999974E-6 : f32
    %287 = vector.broadcast %cst_104 : f32 to vector<16x1xf32>
    %288 = arith.addf %284, %287 : vector<16x1xf32>
    %289 = math.rsqrt %288 : vector<16x1xf32>
    %290 = vector.broadcast %289 : vector<16x1xf32> to vector<16x32xf32>
    %291 = arith.mulf %286, %290 : vector<16x32xf32>
    %c1_105 = arith.constant 1 : index
    %c0_106 = arith.constant 0 : index
    %c0_107 = arith.constant 0 : index
    %292 = vector.load %arg6[%c1_105, %c0_106, %c0_107] : memref<2x1x32xf32, #tpu.memory_space<vmem>>, vector<1x1x32xf32>
    %293 = vector.shape_cast %292 : vector<1x1x32xf32> to vector<1x32xf32>
    %294 = vector.broadcast %293 : vector<1x32xf32> to vector<16x32xf32>
    %295 = arith.mulf %291, %294 : vector<16x32xf32>
    %c1_108 = arith.constant 1 : index
    %c0_109 = arith.constant 0 : index
    %c0_110 = arith.constant 0 : index
    %296 = vector.load %arg7[%c1_108, %c0_109, %c0_110] : memref<2x1x32xf32, #tpu.memory_space<vmem>>, vector<1x1x32xf32>
    %297 = vector.shape_cast %296 : vector<1x1x32xf32> to vector<1x32xf32>
    %298 = vector.broadcast %297 : vector<1x32xf32> to vector<16x32xf32>
    %299 = arith.addf %295, %298 : vector<16x32xf32>
    %300 = arith.truncf %299 : vector<16x32xf32> to vector<16x32xbf16>
    %c1_111 = arith.constant 1 : index
    %c0_112 = arith.constant 0 : index
    %c0_113 = arith.constant 0 : index
    %301 = vector.load %arg8[%c1_111, %c0_112, %c0_113] : memref<2x32x64xbf16, #tpu.memory_space<vmem>>, vector<1x32x64xbf16>
    %302 = vector.shape_cast %301 : vector<1x32x64xbf16> to vector<32x64xbf16>
    %cst_114 = arith.constant dense<0.000000e+00> : vector<16x64xf32>
    %303 = tpu.matmul %300, %302, %cst_114 {dimension_numbers = #tpu.dot_dimension_numbers<[1], [0], [0], [1], [0, 0, 1, 1], [], []>} : vector<16x32xbf16>, vector<32x64xbf16>, vector<16x64xf32> -> vector<16x64xf32>
    %c1_115 = arith.constant 1 : index
    %c0_116 = arith.constant 0 : index
    %c0_117 = arith.constant 0 : index
    %304 = vector.load %arg9[%c1_115, %c0_116, %c0_117] : memref<2x1x64xf32, #tpu.memory_space<vmem>>, vector<1x1x64xf32>
    %305 = vector.shape_cast %304 : vector<1x1x64xf32> to vector<1x64xf32>
    %306 = vector.broadcast %305 : vector<1x64xf32> to vector<16x64xf32>
    %307 = arith.addf %303, %306 : vector<16x64xf32>
    %cst_118 = arith.constant 0.000000e+00 : f32
    %308 = vector.broadcast %cst_118 : f32 to vector<16x64xf32>
    %309 = arith.maximumf %307, %308 : vector<16x64xf32>
    %310 = arith.truncf %309 : vector<16x64xf32> to vector<16x64xbf16>
    %c1_119 = arith.constant 1 : index
    %c0_120 = arith.constant 0 : index
    %c0_121 = arith.constant 0 : index
    %311 = vector.load %arg10[%c1_119, %c0_120, %c0_121] : memref<2x64x32xbf16, #tpu.memory_space<vmem>>, vector<1x64x32xbf16>
    %312 = vector.shape_cast %311 : vector<1x64x32xbf16> to vector<64x32xbf16>
    %cst_122 = arith.constant dense<0.000000e+00> : vector<16x32xf32>
    %313 = tpu.matmul %310, %312, %cst_122 {dimension_numbers = #tpu.dot_dimension_numbers<[1], [0], [0], [1], [0, 0, 1, 1], [], []>} : vector<16x64xbf16>, vector<64x32xbf16>, vector<16x32xf32> -> vector<16x32xf32>
    %c1_123 = arith.constant 1 : index
    %c0_124 = arith.constant 0 : index
    %c0_125 = arith.constant 0 : index
    %314 = vector.load %arg11[%c1_123, %c0_124, %c0_125] : memref<2x1x32xf32, #tpu.memory_space<vmem>>, vector<1x1x32xf32>
    %315 = vector.shape_cast %314 : vector<1x1x32xf32> to vector<1x32xf32>
    %316 = vector.broadcast %315 : vector<1x32xf32> to vector<16x32xf32>
    %317 = arith.addf %313, %316 : vector<16x32xf32>
    %318 = arith.addf %299, %317 : vector<16x32xf32>
    %cst_126 = arith.constant dense<0.000000e+00> : vector<16xf32>
    %319 = vector.multi_reduction <add>, %318, %cst_126 [1] : vector<16x32xf32> to vector<16xf32>
    %320 = vector.shape_cast %319 : vector<16xf32> to vector<16x1xf32>
    %cst_127 = arith.constant 3.200000e+01 : f32
    %321 = vector.broadcast %cst_127 : f32 to vector<16x1xf32>
    %322 = arith.divf %320, %321 : vector<16x1xf32>
    %323 = vector.broadcast %322 : vector<16x1xf32> to vector<16x32xf32>
    %324 = arith.subf %318, %323 : vector<16x32xf32>
    %325 = arith.mulf %324, %324 : vector<16x32xf32>
    %cst_128 = arith.constant dense<0.000000e+00> : vector<16xf32>
    %326 = vector.multi_reduction <add>, %325, %cst_128 [1] : vector<16x32xf32> to vector<16xf32>
    %327 = vector.shape_cast %326 : vector<16xf32> to vector<16x1xf32>
    %cst_129 = arith.constant 3.200000e+01 : f32
    %328 = vector.broadcast %cst_129 : f32 to vector<16x1xf32>
    %329 = arith.divf %327, %328 : vector<16x1xf32>
    %330 = vector.broadcast %322 : vector<16x1xf32> to vector<16x32xf32>
    %331 = arith.subf %318, %330 : vector<16x32xf32>
    %cst_130 = arith.constant 9.99999974E-6 : f32
    %332 = vector.broadcast %cst_130 : f32 to vector<16x1xf32>
    %333 = arith.addf %329, %332 : vector<16x1xf32>
    %334 = math.rsqrt %333 : vector<16x1xf32>
    %335 = vector.broadcast %334 : vector<16x1xf32> to vector<16x32xf32>
    %336 = arith.mulf %331, %335 : vector<16x32xf32>
    %c1_131 = arith.constant 1 : index
    %c0_132 = arith.constant 0 : index
    %c0_133 = arith.constant 0 : index
    %337 = vector.load %arg12[%c1_131, %c0_132, %c0_133] : memref<2x1x32xf32, #tpu.memory_space<vmem>>, vector<1x1x32xf32>
    %338 = vector.shape_cast %337 : vector<1x1x32xf32> to vector<1x32xf32>
    %339 = vector.broadcast %338 : vector<1x32xf32> to vector<16x32xf32>
    %340 = arith.mulf %336, %339 : vector<16x32xf32>
    %c1_134 = arith.constant 1 : index
    %c0_135 = arith.constant 0 : index
    %c0_136 = arith.constant 0 : index
    %341 = vector.load %arg13[%c1_134, %c0_135, %c0_136] : memref<2x1x32xf32, #tpu.memory_space<vmem>>, vector<1x1x32xf32>
    %342 = vector.shape_cast %341 : vector<1x1x32xf32> to vector<1x32xf32>
    %343 = vector.broadcast %342 : vector<1x32xf32> to vector<16x32xf32>
    %344 = arith.addf %340, %343 : vector<16x32xf32>
    %c0_137 = arith.constant 0 : index
    %c0_138 = arith.constant 0 : index
    %345 = vector.load %arg14[%c0_137, %c0_138] : memref<32x128xf32, #tpu.memory_space<vmem>>, vector<32x128xf32>
    %cst_139 = arith.constant dense<0.000000e+00> : vector<16x128xf32>
    %346 = tpu.matmul %344, %345, %cst_139 {dimension_numbers = #tpu.dot_dimension_numbers<[1], [0], [0], [1], [0, 0, 1, 1], [], []>} : vector<16x32xf32>, vector<32x128xf32>, vector<16x128xf32> -> vector<16x128xf32>
    %c0_140 = arith.constant 0 : index
    %c0_141 = arith.constant 0 : index
    %347 = vector.load %arg15[%c0_140, %c0_141] : memref<1x128xf32, #tpu.memory_space<vmem>>, vector<1x128xf32>
    %348 = vector.broadcast %347 : vector<1x128xf32> to vector<16x128xf32>
    %349 = arith.addf %346, %348 : vector<16x128xf32>
    %c0_142 = arith.constant 0 : index
    %c0_143 = arith.constant 0 : index
    %350 = vector.load %arg16[%c0_142, %c0_143] : memref<16x128xf32, #tpu.memory_space<vmem>>, vector<16x128xf32>
    tpu.vector_store %arg16[%c0_142, %c0_143], %349 {strides = array<i32>} : memref<16x128xf32, #tpu.memory_space<vmem>>, vector<16x128xf32>,
    return
  }
}

</mosaic_0001>

<llo_original>
// kernel: tpu_custom_call.1
$region0: #{tpu_custom_call.1}
  #allocation0 [shape = 'u32[]', space=smem, size = 0x4, offset = 0x4, fixed_abs, tag = 'smem constant byte address 0x4 - core index']
  #allocation1 [shape = 'u32[72,128]{1,0:T(1,128)}', space=vmem, size = 0x9000, scoped, tag = 'internal scratch']
  %s0 = inlined_call_operand.hbm [shape: f32[2,8,32], index: 0, kind: input, shape index: {}]
  %s1 = inlined_call_operand.hbm [shape: f32[2,8,8], index: 1, kind: input, shape index: {}]
  %s2 = inlined_call_operand.vmem [shape: bf16[2,32,96], index: 2, kind: input, shape index: {}]
  %s3 = inlined_call_operand.hbm [shape: f32[2,1,96], index: 3, kind: input, shape index: {}]
  %s4 = inlined_call_operand.vmem [shape: bf16[2,32,32], index: 4, kind: input, shape index: {}]
  %s5 = inlined_call_operand.vmem [shape: f32[2,1,32], index: 5, kind: input, shape index: {}]
  %s6 = inlined_call_operand.vmem [shape: f32[2,1,32], index: 6, kind: input, shape index: {}]
  %s7 = inlined_call_operand.hbm [shape: f32[2,1,32], index: 7, kind: input, shape index: {}]
  %s8 = inlined_call_operand.vmem [shape: bf16[2,32,64], index: 8, kind: input, shape index: {}]
  %s9 = inlined_call_operand.vmem [shape: f32[2,1,64], index: 9, kind: input, shape index: {}]
  %s10 = inlined_call_operand.vmem [shape: bf16[2,64,32], index: 10, kind: input, shape index: {}]
  %s11 = inlined_call_operand.vmem [shape: f32[2,1,32], index: 11, kind: input, shape index: {}]
  %s12 = inlined_call_operand.vmem [shape: f32[2,1,32], index: 12, kind: input, shape index: {}]
  %s13 = inlined_call_operand.hbm [shape: f32[2,1,32], index: 13, kind: input, shape index: {}]
  %s14 = inlined_call_operand.hbm [shape: f32[32,128], index: 14, kind: input, shape index: {}]
  %s15 = inlined_call_operand.vmem [shape: f32[1,128], index: 15, kind: input, shape index: {}]
  %s16 = inlined_call_operand.hbm [shape: f32[16,128], index: 16, kind: output, shape index: {}]
  %s17 = sld [smem:[#allocation0]]
  $region98: #{tpu_custom_call.1} parent=0
    _
  %s19 = ssub.s32 1, %s17
  %s20 = scalar_select 0, %s19, %s17
  $region1: #{tpu_custom_call.1} parent=0
    #allocation2 [shape = 'u8[8192]{0}', space=vmem, size = 0x2000, scoped, tag = 'input window, operand 0, single buffered']
    #allocation3 [shape = 's32[1]{0}', space=sflag, size = 0x4, scoped, tag = 'scoped memory for tpu_custom_call.1']
    #allocation4 [shape = 's32[1]{0}', space=sflag, size = 0x4, scoped, tag = 'scoped memory for tpu_custom_call.1']
    #allocation5 [shape = 'u8[8192]{0}', space=vmem, size = 0x2000, scoped, tag = 'input window, operand 1, single buffered']
    #allocation6 [shape = 's32[1]{0}', space=sflag, size = 0x4, scoped, tag = 'scoped memory for tpu_custom_call.1']
    #allocation7 [shape = 'u8[1024]{0}', space=vmem, size = 0x400, scoped, tag = 'input window, operand 3, single buffered']
    #allocation8 [shape = 'u8[1024]{0}', space=vmem, size = 0x400, scoped, tag = 'input window, operand 7, single buffered']
    #allocation9 [shape = 's32[1]{0}', space=sflag, size = 0x4, scoped, tag = 'scoped memory for tpu_custom_call.1']
    #allocation10 [shape = 'u8[1024]{0}', space=vmem, size = 0x400, scoped, tag = 'input window, operand 13, single buffered']
    #allocation11 [shape = 'u8[16384]{0}', space=vmem, size = 0x4000, scoped, tag = 'input window, operand 14, single buffered']
    #allocation12 [shape = 's32[1]{0}', space=sflag, size = 0x4, scoped, tag = 'scoped memory for tpu_custom_call.1']
    #allocation13 [shape = 'u8[8192]{0}', space=vmem, size = 0x2000, scoped, tag = 'output window, operand 0, single buffered']
    %21 = vsyncpa [#allocation3], 0
    %22 = vsyncpa [#allocation6], 0
    %23 = vsyncpa [#allocation9], 0
    %24 = vsyncpa [#allocation12], 0
    %25 = vsyncpa [#allocation4], 0
    // Predicated region
    $region2: #{tpu_custom_call.1} parent=1 // pred_check
      _
    $region3: #{tpu_custom_call.1} parent=1 // pred_check_branch
      %27 = sbr.rel (0) target = $region5
    $region4: #{tpu_custom_call.1} parent=1 // pred_region
      %29 = vsyncadd [#allocation3], 0
      %s30 = sshll.u32 %s0, 4
      %s31 = int_to_ptr.hbm [resolvable:$true] %s30
      %s32 = sshll.u32 [#allocation2], 4
      %s33 = int_to_ptr.vmem [resolvable:$true] %s32
      %38 = dma.hbm_to_vmem [thread:$0]  %s31, 256, %s33, [#allocation3], 128, 128, 8
    $region5: #{tpu_custom_call.1} parent=1 // pred_fallthru
      _
    // Predicated region
    $region6: #{tpu_custom_call.1} parent=1 // pred_check
      _
    $region7: #{tpu_custom_call.1} parent=1 // pred_check_branch
      %40 = sbr.rel (0) target = $region9
    $region8: #{tpu_custom_call.1} parent=1 // pred_region
      %42 = vsyncadd [#allocation6], 0
      %s43 = sshll.u32 %s1, 4
      %s44 = int_to_ptr.hbm [resolvable:$true] %s43
      %s45 = sshll.u32 [#allocation5], 4
      %s46 = int_to_ptr.vmem [resolvable:$true] %s45
      %51 = dma.hbm_to_vmem [thread:$0]  %s44, 256, %s46, [#allocation6], 128, 128, 8
    $region9: #{tpu_custom_call.1} parent=1 // pred_fallthru
      _
    // Predicated region
    $region10: #{tpu_custom_call.1} parent=1 // pred_check
      _
    $region11: #{tpu_custom_call.1} parent=1 // pred_check_branch
      %53 = sbr.rel (0) target = $region13
    $region12: #{tpu_custom_call.1} parent=1 // pred_region
      _
    $region13: #{tpu_custom_call.1} parent=1 // pred_fallthru
      _
    // Predicated region
    $region14: #{tpu_custom_call.1} parent=1 // pred_check
      _
    $region15: #{tpu_custom_call.1} parent=1 // pred_check_branch
      %55 = sbr.rel (0) target = $region17
    $region16: #{tpu_custom_call.1} parent=1 // pred_region
      %57 = vsyncadd [#allocation6], 0
      %s58 = sshll.u32 %s3, 4
      %s59 = int_to_ptr.hbm [resolvable:$true] %s58
      %s60 = sshll.u32 [#allocation7], 4
      %s61 = int_to_ptr.vmem [resolvable:$true] %s60
      %66 = dma.hbm_to_vmem [thread:$0]  %s59, 32, %s61, [#allocation6], 16, 16, 1
    $region17: #{tpu_custom_call.1} parent=1 // pred_fallthru
      _
    // Predicated region
    $region18: #{tpu_custom_call.1} parent=1 // pred_check
      _
    $region19: #{tpu_custom_call.1} parent=1 // pred_check_branch
      %68 = sbr.rel (0) target = $region21
    $region20: #{tpu_custom_call.1} parent=1 // pred_region
      _
    $region21: #{tpu_custom_call.1} parent=1 // pred_fallthru
      _
    // Predicated region
    $region22: #{tpu_custom_call.1} parent=1 // pred_check
      _
    $region23: #{tpu_custom_call.1} parent=1 // pred_check_branch
      %70 = sbr.rel (0) target = $region25
    $region24: #{tpu_custom_call.1} parent=1 // pred_region
      _
    $region25: #{tpu_custom_call.1} parent=1 // pred_fallthru
      _
    // Predicated region
    $region26: #{tpu_custom_call.1} parent=1 // pred_check
      _
    $region27: #{tpu_custom_call.1} parent=1 // pred_check_branch
      %72 = sbr.rel (0) target = $region29
    $region28: #{tpu_custom_call.1} parent=1 // pred_region
      _
    $region29: #{tpu_custom_call.1} parent=1 // pred_fallthru
      _
    // Predicated region
    $region30: #{tpu_custom_call.1} parent=1 // pred_check
      _
    $region31: #{tpu_custom_call.1} parent=1 // pred_check_branch
      %74 = sbr.rel (0) target = $region33
    $region32: #{tpu_custom_call.1} parent=1 // pred_region
      %76 = vsyncadd [#allocation9], 0
      %s77 = sshll.u32 %s7, 4
      %s78 = int_to_ptr.hbm [resolvable:$true] %s77
      %s79 = sshll.u32 [#allocation8], 4
      %s80 = int_to_ptr.vmem [resolvable:$true] %s79
      %85 = dma.hbm_to_vmem [thread:$0]  %s78, 32, %s80, [#allocation9], 16, 16, 1
    $region33: #{tpu_custom_call.1} parent=1 // pred_fallthru
      _
    // Predicated region
    $region34: #{tpu_custom_call.1} parent=1 // pred_check
      _
    $region35: #{tpu_custom_call.1} parent=1 // pred_check_branch
      %87 = sbr.rel (0) target = $region37
    $region36: #{tpu_custom_call.1} parent=1 // pred_region
      _
    $region37: #{tpu_custom_call.1} parent=1 // pred_fallthru
      _
    // Predicated region
    $region38: #{tpu_custom_call.1} parent=1 // pred_check
      _
    $region39: #{tpu_custom_call.1} parent=1 // pred_check_branch
      %89 = sbr.rel (0) target = $region41
    $region40: #{tpu_custom_call.1} parent=1 // pred_region
      _
    $region41: #{tpu_custom_call.1} parent=1 // pred_fallthru
      _
    // Predicated region
    $region42: #{tpu_custom_call.1} parent=1 // pred_check
      _
    $region43: #{tpu_custom_call.1} parent=1 // pred_check_branch
      %91 = sbr.rel (0) target = $region45
    $region44: #{tpu_custom_call.1} parent=1 // pred_region
      _
    $region45: #{tpu_custom_call.1} parent=1 // pred_fallthru
      _
    // Predicated region
    $region46: #{tpu_custom_call.1} parent=1 // pred_check
      _
    $region47: #{tpu_custom_call.1} parent=1 // pred_check_branch
      %93 = sbr.rel (0) target = $region49
    $region48: #{tpu_custom_call.1} parent=1 // pred_region
      _
    $region49: #{tpu_custom_call.1} parent=1 // pred_fallthru
      _
    // Predicated region
    $region50: #{tpu_custom_call.1} parent=1 // pred_check
      _
    $region51: #{tpu_custom_call.1} parent=1 // pred_check_branch
      %95 = sbr.rel (0) target = $region53
    $region52: #{tpu_custom_call.1} parent=1 // pred_region
      _
    $region53: #{tpu_custom_call.1} parent=1 // pred_fallthru
      _
    // Predicated region
    $region54: #{tpu_custom_call.1} parent=1 // pred_check
      _
    $region55: #{tpu_custom_call.1} parent=1 // pred_check_branch
      %97 = sbr.rel (0) target = $region57
    $region56: #{tpu_custom_call.1} parent=1 // pred_region
      %99 = vsyncadd [#allocation9], 0
      %s100 = sshll.u32 %s13, 4
      %s101 = int_to_ptr.hbm [resolvable:$true] %s100
      %s102 = sshll.u32 [#allocation10], 4
      %s103 = int_to_ptr.vmem [resolvable:$true] %s102
      %108 = dma.hbm_to_vmem [thread:$0]  %s101, 32, %s103, [#allocation9], 16, 16, 1
    $region57: #{tpu_custom_call.1} parent=1 // pred_fallthru
      _
    // Predicated region
    $region58: #{tpu_custom_call.1} parent=1 // pred_check
      _
    $region59: #{tpu_custom_call.1} parent=1 // pred_check_branch
      %110 = sbr.rel (0) target = $region61
    $region60: #{tpu_custom_call.1} parent=1 // pred_region
      %112 = vsyncadd [#allocation12], 0
      %s113 = sshll.u32 %s14, 4
      %s114 = int_to_ptr.hbm [resolvable:$true] %s113
      %s115 = sshll.u32 [#allocation11], 4
      %s116 = int_to_ptr.vmem [resolvable:$true] %s115
      %121 = dma.hbm_to_vmem [thread:$0]  %s114, 512, %s116, [#allocation12], 128, 128, 8
    $region61: #{tpu_custom_call.1} parent=1 // pred_fallthru
      _
    // Predicated region
    $region62: #{tpu_custom_call.1} parent=1 // pred_check
      _
    $region63: #{tpu_custom_call.1} parent=1 // pred_check_branch
      %123 = sbr.rel (0) target = $region65
    $region64: #{tpu_custom_call.1} parent=1 // pred_region
      _
    $region65: #{tpu_custom_call.1} parent=1 // pred_fallthru
      _
    // Predicated region
    $region66: #{tpu_custom_call.1} parent=1 // pred_check
      _
    $region67: #{tpu_custom_call.1} parent=1 // pred_check_branch
      %125 = sbr.rel (0) target = $region69
    $region68: #{tpu_custom_call.1} parent=1 // pred_region
      %127 = dma.done [#allocation3], 256
    $region69: #{tpu_custom_call.1} parent=1 // pred_fallthru
      _
    // Predicated region
    $region70: #{tpu_custom_call.1} parent=1 // pred_check
      _
    $region71: #{tpu_custom_call.1} parent=1 // pred_check_branch
      %129 = sbr.rel (0) target = $region73
    $region72: #{tpu_custom_call.1} parent=1 // pred_region
      %131 = dma.done [#allocation6], 256
    $region73: #{tpu_custom_call.1} parent=1 // pred_fallthru
      _
    // Predicated region
    $region74: #{tpu_custom_call.1} parent=1 // pred_check
      _
    $region75: #{tpu_custom_call.1} parent=1 // pred_check_branch
      %133 = sbr.rel (0) target = $region77
    $region76: #{tpu_custom_call.1} parent=1 // pred_region
      %135 = dma.done [#allocation6], 32
    $region77: #{tpu_custom_call.1} parent=1 // pred_fallthru
      _
    // Predicated region
    $region78: #{tpu_custom_call.1} parent=1 // pred_check
      _
    $region79: #{tpu_custom_call.1} parent=1 // pred_check_branch
      %137 = sbr.rel (0) target = $region81
    $region80: #{tpu_custom_call.1} parent=1 // pred_region
      %139 = dma.done [#allocation9], 32
    $region81: #{tpu_custom_call.1} parent=1 // pred_fallthru
      _
    // Predicated region
    $region82: #{tpu_custom_call.1} parent=1 // pred_check
      _
    $region83: #{tpu_custom_call.1} parent=1 // pred_check_branch
      %141 = sbr.rel (0) target = $region85
    $region84: #{tpu_custom_call.1} parent=1 // pred_region
      %143 = dma.done [#allocation9], 32
    $region85: #{tpu_custom_call.1} parent=1 // pred_fallthru
      _
    // Predicated region
    $region86: #{tpu_custom_call.1} parent=1 // pred_check
      _
    $region87: #{tpu_custom_call.1} parent=1 // pred_check_branch
      %145 = sbr.rel (0) target = $region89
    $region88: #{tpu_custom_call.1} parent=1 // pred_region
      %147 = dma.done [#allocation12], 512
    $region89: #{tpu_custom_call.1} parent=1 // pred_fallthru
      _
    %v149 = vld [vmem:[#allocation5] sm:$0xff]
    %v150 = vld [vmem:[#allocation5 + $0x8] sm:$0xff]
    %v151 = vld [vmem:[#allocation2] sm:$0xff]
    %v152 = vld [vmem:[#allocation2 + $0x8] sm:$0xff]
    %v153 = vpack.c.bf16 %v152, %v151
    %v154 = vld [vmem:[%s2] sm:$0xf]
    %v155 = vld [vmem:[%s2 + $0x4] sm:$0xf]
    %v156 = vld [vmem:[%s2 + $0x8] sm:$0xf]
    %v157 = vld [vmem:[%s2 + $0xc] sm:$0xf]
    %v158 = vld [vmem:[#allocation7] sm:$0x1]
    %v160 = vperm.slane %v158, 0
    %v166 = vunpack.c.l.b16 %v154
    %v167 = vunpack.c.l.b16 %v155
    %v168 = vunpack.c.l.b16 %v156
    %v169 = vunpack.c.l.b16 %v157
    %v170 = vpack.c.b16 %v167, %v166
    %v171 = vpack.c.b16 %v169, %v168
    %vm174 = vcmask 261120
    %v176 = vsel %vm174, %v153, 0
    %178 = vmatpush.bf16.msra.mxu0 0
    %179 = vmatpush.bf16.msra.mxu0 0
    %180 = vmatpush.bf16.msra.mxu0 0
    %181 = vmatpush.bf16.msra.mxu0 0
    %182 = vmatpush.bf16.msra.mxu0 0
    %183 = vmatpush.bf16.msra.mxu0 0
    %184 = vmatpush.bf16.msra.mxu0 %v171
    %185 = vmatpush.bf16.msra.mxu0 %v170
    %186 = vmatmul.bf16.gmra.mxu0 %v176
    %v187 = vpop.f32.mrf.mxu0
    %v188 = vadd.f32 %v160, %v187
    %v189 = vpop.f32.mrf.mxu0
    %v190 = vadd.f32 %v160, %v189
    %191 = vdwg.mxu0
    %v192 = vpack.c.bf16 %v188, %v188
    %v193 = vpack.c.bf16 %v190, %v190
    %v195 = vunpack.c.l.b16 %v192
    %v196 = vpack.c.b16 %v195, %v195
    %197 = vrot.lane.b32.xlu0 %v196, 96
    %v198 = vpop.permute.xlu0 %197
    %vm199 = vcmask 64512
    %v201 = vsel %vm199, %v192, 0
    %v204 = vsel %vm199, %v198, 0
    %206 = vmatpush.bf16.xpose.msra.mxu0 0
    %207 = vmatpush.bf16.xpose.msra.mxu0 0
    %208 = vmatpush.bf16.xpose.msra.mxu0 0
    %209 = vmatpush.bf16.xpose.msra.mxu0 0
    %210 = vmatpush.bf16.xpose.msra.mxu0 0
    %211 = vmatpush.bf16.xpose.msra.mxu0 0
    %212 = vmatpush.bf16.xpose.msra.mxu0 0
    %213 = vmatpush.bf16.xpose.msra.mxu0 %v204
    %214 = vmatmul.bf16.gmra.mxu0 %v201
    %v215 = vpop.f32.mrf.mxu0
    %v216 = vadd.f32 %v149, %v215
    %v217 = vpop.f32.mrf.mxu0
    %218 = vdwg.mxu0
    %v220 = vunpack.c.l.b16 %v193
    %v221 = vpack.c.b16 %v220, %v220
    %222 = vrot.lane.b32.xlu0 %v221, 96
    %v223 = vpop.permute.xlu0 %222
    %v225 = vsel %vm199, %v193, 0
    %v228 = vsel %vm199, %v223, 0
    %230 = vmatpush.bf16.xpose.msra.mxu0 0
    %231 = vmatpush.bf16.xpose.msra.mxu0 0
    %232 = vmatpush.bf16.xpose.msra.mxu0 0
    %233 = vmatpush.bf16.xpose.msra.mxu0 0
    %234 = vmatpush.bf16.xpose.msra.mxu0 0
    %235 = vmatpush.bf16.xpose.msra.mxu0 0
    %236 = vmatpush.bf16.xpose.msra.mxu0 0
    %237 = vmatpush.bf16.xpose.msra.mxu0 %v228
    %238 = vmatmul.bf16.gmra.mxu0 %v225
    %v239 = vpop.f32.mrf.mxu0
    %v240 = vadd.f32 %v150, %v239
    %v241 = vpop.f32.mrf.mxu0
    %242 = vdwg.mxu0
    %v243 = vsel %vm199, %v216, -inf
    %244 = vmax.xlane.f32.xlu0 %v243
    %v245 = vpop.xlane.xlu0 %244
    %v246 = vsel %vm199, %v240, -inf
    %247 = vmax.xlane.f32.xlu0 %v246
    %v248 = vpop.xlane.xlu0 %247
    %v249 = vsub.f32 %v216, %v245
    %v250 = vsub.f32 %v240, %v248
    %v251 = vmul.f32 %v249, 1.442695
    %v252 = vpow.pop %v251
    %v253 = vmul.f32 %v250, 1.442695
    %v254 = vpow.pop %v253
    %v255 = vsel %vm199, %v252, 0.0
    %256 = vadd.xlane.f32.xlu0 %v255
    %v257 = vpop.xlane.xlu0 %256
    %v258 = vsel %vm199, %v254, 0.0
    %259 = vadd.xlane.f32.xlu0 %v258
    %v260 = vpop.xlane.xlu0 %259
    %v261 = vrcp.pop %v257
    %v262 = vrcp.pop %v260
    %v263 = vmul.f32 %v252, %v261
    %v264 = vmul.f32 %v254, %v262
    %v265 = vpack.c.bf16 %v263, %v263
    %v266 = vpack.c.bf16 %v264, %v264
    %267 = vrot.lane.b32.xlu0 %v196, 64
    %v268 = vpop.permute.xlu0 %267
    %v270 = vsel %vm199, %v265, 0
    %vm272 = vcmask 1043456
    %v274 = vsel %vm272, %v268, 0
    %276 = vmatpush.bf16.msra.mxu0 0
    %277 = vmatpush.bf16.msra.mxu0 0
    %278 = vmatpush.bf16.msra.mxu0 0
    %279 = vmatpush.bf16.msra.mxu0 0
    %280 = vmatpush.bf16.msra.mxu0 0
    %281 = vmatpush.bf16.msra.mxu0 0
    %282 = vmatpush.bf16.msra.mxu0 0
    %283 = vmatpush.bf16.msra.mxu0 %v274
    %284 = vmatmul.bf16.gmra.mxu0 %v270
    %v285 = vpop.f32.mrf.mxu0
    %v286 = vadd.f32 0.0, %v285
    %v287 = vpop.f32.mrf.mxu0
    %288 = vdwg.mxu0
    %289 = vrot.lane.b32.xlu0 %v221, 64
    %v290 = vpop.permute.xlu0 %289
    %v292 = vsel %vm199, %v266, 0
    %v295 = vsel %vm272, %v290, 0
    %297 = vmatpush.bf16.msra.mxu0 0
    %298 = vmatpush.bf16.msra.mxu0 0
    %299 = vmatpush.bf16.msra.mxu0 0
    %300 = vmatpush.bf16.msra.mxu0 0
    %301 = vmatpush.bf16.msra.mxu0 0
    %302 = vmatpush.bf16.msra.mxu0 0
    %303 = vmatpush.bf16.msra.mxu0 0
    %304 = vmatpush.bf16.msra.mxu0 %v295
    %305 = vmatmul.bf16.gmra.mxu0 %v292
    %v306 = vpop.f32.mrf.mxu0
    %v307 = vadd.f32 0.0, %v306
    %v308 = vpop.f32.mrf.mxu0
    %309 = vdwg.mxu0
    %310 = vrot.lane.b32.xlu0 %v196, 120
    %v311 = vpop.permute.xlu0 %310
    %312 = vrot.lane.b32.xlu0 %v196, 88
    %v313 = vpop.permute.xlu0 %312
    %v315 = vsel %vm199, %v311, 0
    %v318 = vsel %vm199, %v313, 0
    %320 = vmatpush.bf16.xpose.msra.mxu0 0
    %321 = vmatpush.bf16.xpose.msra.mxu0 0
    %322 = vmatpush.bf16.xpose.msra.mxu0 0
    %323 = vmatpush.bf16.xpose.msra.mxu0 0
    %324 = vmatpush.bf16.xpose.msra.mxu0 0
    %325 = vmatpush.bf16.xpose.msra.mxu0 0
    %326 = vmatpush.bf16.xpose.msra.mxu0 0
    %327 = vmatpush.bf16.xpose.msra.mxu0 %v318
    %328 = vmatmul.bf16.gmra.mxu0 %v315
    %v329 = vpop.f32.mrf.mxu0
    %v330 = vadd.f32 %v149, %v329
    %v331 = vpop.f32.mrf.mxu0
    %332 = vdwg.mxu0
    %333 = vrot.lane.b32.xlu0 %v221, 120
    %v334 = vpop.permute.xlu0 %333
    %335 = vrot.lane.b32.xlu0 %v221, 88
    %v336 = vpop.permute.xlu0 %335
    %v338 = vsel %vm199, %v334, 0
    %v341 = vsel %vm199, %v336, 0
    %343 = vmatpush.bf16.xpose.msra.mxu0 0
    %344 = vmatpush.bf16.xpose.msra.mxu0 0
    %345 = vmatpush.bf16.xpose.msra.mxu0 0
    %346 = vmatpush.bf16.xpose.msra.mxu0 0
    %347 = vmatpush.bf16.xpose.msra.mxu0 0
    %348 = vmatpush.bf16.xpose.msra.mxu0 0
    %349 = vmatpush.bf16.xpose.msra.mxu0 0
    %350 = vmatpush.bf16.xpose.msra.mxu0 %v341
    %351 = vmatmul.bf16.gmra.mxu0 %v338
    %v352 = vpop.f32.mrf.mxu0
    %v353 = vadd.f32 %v150, %v352
    %v354 = vpop.f32.mrf.mxu0
    %355 = vdwg.mxu0
    %v356 = vsel %vm199, %v330, -inf
    %357 = vmax.xlane.f32.xlu0 %v356
    %v358 = vpop.xlane.xlu0 %357
    %v359 = vsel %vm199, %v353, -inf
    %360 = vmax.xlane.f32.xlu0 %v359
    %v361 = vpop.xlane.xlu0 %360
    %v362 = vsub.f32 %v330, %v358
    %v363 = vsub.f32 %v353, %v361
    %v364 = vmul.f32 %v362, 1.442695
    %v365 = vpow.pop %v364
    %v366 = vmul.f32 %v363, 1.442695
    %v367 = vpow.pop %v366
    %v368 = vsel %vm199, %v365, 0.0
    %369 = vadd.xlane.f32.xlu0 %v368
    %v370 = vpop.xlane.xlu0 %369
    %v371 = vsel %vm199, %v367, 0.0
    %372 = vadd.xlane.f32.xlu0 %v371
    %v373 = vpop.xlane.xlu0 %372
    %v374 = vrcp.pop %v370
    %v375 = vrcp.pop %v373
    %v376 = vmul.f32 %v365, %v374
    %v377 = vmul.f32 %v367, %v375
    %v378 = vpack.c.bf16 %v376, %v376
    %v379 = vpack.c.bf16 %v377, %v377
    %380 = vrot.lane.b32.xlu0 %v196, 56
    %v381 = vpop.permute.xlu0 %380
    %v383 = vsel %vm199, %v378, 0
    %v386 = vsel %vm272, %v381, 0
    %388 = vmatpush.bf16.msra.mxu0 0
    %389 = vmatpush.bf16.msra.mxu0 0
    %390 = vmatpush.bf16.msra.mxu0 0
    %391 = vmatpush.bf16.msra.mxu0 0
    %392 = vmatpush.bf16.msra.mxu0 0
    %393 = vmatpush.bf16.msra.mxu0 0
    %394 = vmatpush.bf16.msra.mxu0 0
    %395 = vmatpush.bf16.msra.mxu0 %v386
    %396 = vmatmul.bf16.gmra.mxu0 %v383
    %v397 = vpop.f32.mrf.mxu0
    %v398 = vadd.f32 0.0, %v397
    %v399 = vpop.f32.mrf.mxu0
    %400 = vdwg.mxu0
    %401 = vrot.lane.b32.xlu0 %v221, 56
    %v402 = vpop.permute.xlu0 %401
    %v404 = vsel %vm199, %v379, 0
    %v407 = vsel %vm272, %v402, 0
    %409 = vmatpush.bf16.msra.mxu0 0
    %410 = vmatpush.bf16.msra.mxu0 0
    %411 = vmatpush.bf16.msra.mxu0 0
    %412 = vmatpush.bf16.msra.mxu0 0
    %413 = vmatpush.bf16.msra.mxu0 0
    %414 = vmatpush.bf16.msra.mxu0 0
    %415 = vmatpush.bf16.msra.mxu0 0
    %416 = vmatpush.bf16.msra.mxu0 %v407
    %417 = vmatmul.bf16.gmra.mxu0 %v404
    %v418 = vpop.f32.mrf.mxu0
    %v419 = vadd.f32 0.0, %v418
    %v420 = vpop.f32.mrf.mxu0
    %421 = vdwg.mxu0
    %422 = vrot.lane.b32.xlu0 %v196, 112
    %v423 = vpop.permute.xlu0 %422
    %424 = vrot.lane.b32.xlu0 %v196, 80
    %v425 = vpop.permute.xlu0 %424
    %v427 = vsel %vm199, %v423, 0
    %v430 = vsel %vm199, %v425, 0
    %432 = vmatpush.bf16.xpose.msra.mxu0 0
    %433 = vmatpush.bf16.xpose.msra.mxu0 0
    %434 = vmatpush.bf16.xpose.msra.mxu0 0
    %435 = vmatpush.bf16.xpose.msra.mxu0 0
    %436 = vmatpush.bf16.xpose.msra.mxu0 0
    %437 = vmatpush.bf16.xpose.msra.mxu0 0
    %438 = vmatpush.bf16.xpose.msra.mxu0 0
    %439 = vmatpush.bf16.xpose.msra.mxu0 %v430
    %440 = vmatmul.bf16.gmra.mxu0 %v427
    %v441 = vpop.f32.mrf.mxu0
    %v442 = vadd.f32 %v149, %v441
    %v443 = vpop.f32.mrf.mxu0
    %444 = vdwg.mxu0
    %445 = vrot.lane.b32.xlu0 %v221, 112
    %v446 = vpop.permute.xlu0 %445
    %447 = vrot.lane.b32.xlu0 %v221, 80
    %v448 = vpop.permute.xlu0 %447
    %v450 = vsel %vm199, %v446, 0
    %v453 = vsel %vm199, %v448, 0
    %455 = vmatpush.bf16.xpose.msra.mxu0 0
    %456 = vmatpush.bf16.xpose.msra.mxu0 0
    %457 = vmatpush.bf16.xpose.msra.mxu0 0
    %458 = vmatpush.bf16.xpose.msra.mxu0 0
    %459 = vmatpush.bf16.xpose.msra.mxu0 0
    %460 = vmatpush.bf16.xpose.msra.mxu0 0
    %461 = vmatpush.bf16.xpose.msra.mxu0 0
    %462 = vmatpush.bf16.xpose.msra.mxu0 %v453
    %463 = vmatmul.bf16.gmra.mxu0 %v450
    %v464 = vpop.f32.mrf.mxu0
    %v465 = vadd.f32 %v150, %v464
    %v466 = vpop.f32.mrf.mxu0
    %467 = vdwg.mxu0
    %v468 = vsel %vm199, %v442, -inf
    %469 = vmax.xlane.f32.xlu0 %v468
    %v470 = vpop.xlane.xlu0 %469
    %v471 = vsel %vm199, %v465, -inf
    %472 = vmax.xlane.f32.xlu0 %v471
    %v473 = vpop.xlane.xlu0 %472
    %v474 = vsub.f32 %v442, %v470
    %v475 = vsub.f32 %v465, %v473
    %v476 = vmul.f32 %v474, 1.442695
    %v477 = vpow.pop %v476
    %v478 = vmul.f32 %v475, 1.442695
    %v479 = vpow.pop %v478
    %v480 = vsel %vm199, %v477, 0.0
    %481 = vadd.xlane.f32.xlu0 %v480
    %v482 = vpop.xlane.xlu0 %481
    %v483 = vsel %vm199, %v479, 0.0
    %484 = vadd.xlane.f32.xlu0 %v483
    %v485 = vpop.xlane.xlu0 %484
    %v486 = vrcp.pop %v482
    %v487 = vrcp.pop %v485
    %v488 = vmul.f32 %v477, %v486
    %v489 = vmul.f32 %v479, %v487
    %v490 = vpack.c.bf16 %v488, %v488
    %v491 = vpack.c.bf16 %v489, %v489
    %492 = vrot.lane.b32.xlu0 %v196, 48
    %v493 = vpop.permute.xlu0 %492
    %v495 = vsel %vm199, %v490, 0
    %v498 = vsel %vm272, %v493, 0
    %500 = vmatpush.bf16.msra.mxu0 0
    %501 = vmatpush.bf16.msra.mxu0 0
    %502 = vmatpush.bf16.msra.mxu0 0
    %503 = vmatpush.bf16.msra.mxu0 0
    %504 = vmatpush.bf16.msra.mxu0 0
    %505 = vmatpush.bf16.msra.mxu0 0
    %506 = vmatpush.bf16.msra.mxu0 0
    %507 = vmatpush.bf16.msra.mxu0 %v498
    %508 = vmatmul.bf16.gmra.mxu0 %v495
    %v509 = vpop.f32.mrf.mxu0
    %v510 = vadd.f32 0.0, %v509
    %v511 = vpop.f32.mrf.mxu0
    %512 = vdwg.mxu0
    %513 = vrot.lane.b32.xlu0 %v221, 48
    %v514 = vpop.permute.xlu0 %513
    %v516 = vsel %vm199, %v491, 0
    %v519 = vsel %vm272, %v514, 0
    %521 = vmatpush.bf16.msra.mxu0 0
    %522 = vmatpush.bf16.msra.mxu0 0
    %523 = vmatpush.bf16.msra.mxu0 0
    %524 = vmatpush.bf16.msra.mxu0 0
    %525 = vmatpush.bf16.msra.mxu0 0
    %526 = vmatpush.bf16.msra.mxu0 0
    %527 = vmatpush.bf16.msra.mxu0 0
    %528 = vmatpush.bf16.msra.mxu0 %v519
    %529 = vmatmul.bf16.gmra.mxu0 %v516
    %v530 = vpop.f32.mrf.mxu0
    %v531 = vadd.f32 0.0, %v530
    %v532 = vpop.f32.mrf.mxu0
    %533 = vdwg.mxu0
    %534 = vrot.lane.b32.xlu0 %v196, 104
    %v535 = vpop.permute.xlu0 %534
    %536 = vrot.lane.b32.xlu0 %v196, 72
    %v537 = vpop.permute.xlu0 %536
    %v539 = vsel %vm199, %v535, 0
    %v542 = vsel %vm199, %v537, 0
    %544 = vmatpush.bf16.xpose.msra.mxu0 0
    %545 = vmatpush.bf16.xpose.msra.mxu0 0
    %546 = vmatpush.bf16.xpose.msra.mxu0 0
    %547 = vmatpush.bf16.xpose.msra.mxu0 0
    %548 = vmatpush.bf16.xpose.msra.mxu0 0
    %549 = vmatpush.bf16.xpose.msra.mxu0 0
    %550 = vmatpush.bf16.xpose.msra.mxu0 0
    %551 = vmatpush.bf16.xpose.msra.mxu0 %v542
    %552 = vmatmul.bf16.gmra.mxu0 %v539
    %v553 = vpop.f32.mrf.mxu0
    %v554 = vadd.f32 %v149, %v553
    %v555 = vpop.f32.mrf.mxu0
    %556 = vdwg.mxu0
    %557 = vrot.lane.b32.xlu0 %v221, 104
    %v558 = vpop.permute.xlu0 %557
    %559 = vrot.lane.b32.xlu0 %v221, 72
    %v560 = vpop.permute.xlu0 %559
    %v562 = vsel %vm199, %v558, 0
    %v565 = vsel %vm199, %v560, 0
    %567 = vmatpush.bf16.xpose.msra.mxu0 0
    %568 = vmatpush.bf16.xpose.msra.mxu0 0
    %569 = vmatpush.bf16.xpose.msra.mxu0 0
    %570 = vmatpush.bf16.xpose.msra.mxu0 0
    %571 = vmatpush.bf16.xpose.msra.mxu0 0
    %572 = vmatpush.bf16.xpose.msra.mxu0 0
    %573 = vmatpush.bf16.xpose.msra.mxu0 0
    %574 = vmatpush.bf16.xpose.msra.mxu0 %v565
    %575 = vmatmul.bf16.gmra.mxu0 %v562
    %v576 = vpop.f32.mrf.mxu0
    %v577 = vadd.f32 %v150, %v576
    %v578 = vpop.f32.mrf.mxu0
    %579 = vdwg.mxu0
    %v580 = vsel %vm199, %v554, -inf
    %581 = vmax.xlane.f32.xlu0 %v580
    %v582 = vpop.xlane.xlu0 %581
    %v583 = vsel %vm199, %v577, -inf
    %584 = vmax.xlane.f32.xlu0 %v583
    %v585 = vpop.xlane.xlu0 %584
    %v586 = vsub.f32 %v554, %v582
    %v587 = vsub.f32 %v577, %v585
    %v588 = vmul.f32 %v586, 1.442695
    %v589 = vpow.pop %v588
    %v590 = vmul.f32 %v587, 1.442695
    %v591 = vpow.pop %v590
    %v592 = vsel %vm199, %v589, 0.0
    %593 = vadd.xlane.f32.xlu0 %v592
    %v594 = vpop.xlane.xlu0 %593
    %v595 = vsel %vm199, %v591, 0.0
    %596 = vadd.xlane.f32.xlu0 %v595
    %v597 = vpop.xlane.xlu0 %596
    %v598 = vrcp.pop %v594
    %v599 = vrcp.pop %v597
    %v600 = vmul.f32 %v589, %v598
    %v601 = vmul.f32 %v591, %v599
    %v602 = vpack.c.bf16 %v600, %v600
    %v603 = vpack.c.bf16 %v601, %v601
    %604 = vrot.lane.b32.xlu0 %v196, 40
    %v605 = vpop.permute.xlu0 %604
    %v607 = vsel %vm199, %v602, 0
    %v610 = vsel %vm272, %v605, 0
    %612 = vmatpush.bf16.msra.mxu0 0
    %613 = vmatpush.bf16.msra.mxu0 0
    %614 = vmatpush.bf16.msra.mxu0 0
    %615 = vmatpush.bf16.msra.mxu0 0
    %616 = vmatpush.bf16.msra.mxu0 0
    %617 = vmatpush.bf16.msra.mxu0 0
    %618 = vmatpush.bf16.msra.mxu0 0
    %619 = vmatpush.bf16.msra.mxu0 %v610
    %620 = vmatmul.bf16.gmra.mxu0 %v607
    %v621 = vpop.f32.mrf.mxu0
    %v622 = vadd.f32 0.0, %v621
    %v623 = vpop.f32.mrf.mxu0
    %624 = vdwg.mxu0
    %625 = vrot.lane.b32.xlu0 %v221, 40
    %v626 = vpop.permute.xlu0 %625
    %v628 = vsel %vm199, %v603, 0
    %v631 = vsel %vm272, %v626, 0
    %633 = vmatpush.bf16.msra.mxu0 0
    %634 = vmatpush.bf16.msra.mxu0 0
    %635 = vmatpush.bf16.msra.mxu0 0
    %636 = vmatpush.bf16.msra.mxu0 0
    %637 = vmatpush.bf16.msra.mxu0 0
    %638 = vmatpush.bf16.msra.mxu0 0
    %639 = vmatpush.bf16.msra.mxu0 0
    %640 = vmatpush.bf16.msra.mxu0 %v631
    %641 = vmatmul.bf16.gmra.mxu0 %v628
    %v642 = vpop.f32.mrf.mxu0
    %v643 = vadd.f32 0.0, %v642
    %v644 = vpop.f32.mrf.mxu0
    %645 = vdwg.mxu0
    %648 = vrot.lane.b32.xlu0 %v398, 8
    %v649 = vpop.permute.xlu0 %648
    %650 = vrot.lane.b32.xlu0 %v419, 8
    %v651 = vpop.permute.xlu0 %650
    %656 = vrot.lane.b32.xlu0 %v510, 16
    %v657 = vpop.permute.xlu0 %656
    %658 = vrot.lane.b32.xlu0 %v531, 16
    %v659 = vpop.permute.xlu0 %658
    %664 = vrot.lane.b32.xlu0 %v622, 24
    %v665 = vpop.permute.xlu0 %664
    %666 = vrot.lane.b32.xlu0 %v643, 24
    %v667 = vpop.permute.xlu0 %666
    %v670 = vsel %vm199, %v286, %v649
    %v671 = vsel %vm199, %v307, %v651
    %vm672 = vcmask 130048
    %v673 = vsel %vm672, %v670, %v657
    %v674 = vsel %vm672, %v671, %v659
    %vm675 = vcmask 195584
    %v676 = vsel %vm675, %v673, %v665
    %v677 = vsel %vm675, %v674, %v667
    %v678 = vpack.c.bf16 %v677, %v676
    %v679 = vld [vmem:[%s4] sm:$0xf]
    %v680 = vld [vmem:[%s4 + $0x4] sm:$0xf]
    %v681 = vld [vmem:[%s4 + $0x8] sm:$0xf]
    %v682 = vld [vmem:[%s4 + $0xc] sm:$0xf]
    %v683 = vld [vmem:[%s5] sm:$0x1]
    %v685 = vperm.slane %v683, 0
    %v691 = vunpack.c.l.b16 %v679
    %v692 = vunpack.c.l.b16 %v680
    %v693 = vunpack.c.l.b16 %v681
    %v694 = vunpack.c.l.b16 %v682
    %v695 = vpack.c.b16 %v692, %v691
    %v696 = vpack.c.b16 %v694, %v693
    %v700 = vsel %vm174, %v678, 0
    %702 = vmatpush.bf16.msra.mxu0 0
    %703 = vmatpush.bf16.msra.mxu0 0
    %704 = vmatpush.bf16.msra.mxu0 0
    %705 = vmatpush.bf16.msra.mxu0 0
    %706 = vmatpush.bf16.msra.mxu0 0
    %707 = vmatpush.bf16.msra.mxu0 0
    %708 = vmatpush.bf16.msra.mxu0 %v696
    %709 = vmatpush.bf16.msra.mxu0 %v695
    %710 = vmatmul.bf16.gmra.mxu0 %v700
    %v711 = vpop.f32.mrf.mxu0
    %v712 = vadd.f32 %v685, %v711
    %v713 = vpop.f32.mrf.mxu0
    %v714 = vadd.f32 %v685, %v713
    %715 = vdwg.mxu0
    %v716 = vadd.f32 %v151, %v712
    %v717 = vadd.f32 %v152, %v714
    %v718 = vsel %vm174, %v716, 0.0
    %719 = vadd.xlane.f32.xlu0 %v718
    %v720 = vpop.xlane.xlu0 %719
    %v721 = vsel %vm174, %v717, 0.0
    %722 = vadd.xlane.f32.xlu0 %v721
    %v723 = vpop.xlane.xlu0 %722
    %v724 = vrcp.pop 32.0
    %v725 = vmul.f32 32.0, %v724
    %v726 = vsub.f32 1.0, %v725
    %v727 = vmul.f32 %v724, %v726
    %v728 = vadd.f32 %v724, %v727
    %vm729 = vweird.f32 %v724
    %v730 = vsel %vm729, %v724, %v728
    %v731 = vmul.f32 %v720, %v730
    %v732 = vmul.f32 %v723, %v730
    %v733 = vsub.f32 %v716, %v731
    %v734 = vsub.f32 %v717, %v732
    %v735 = vmul.f32 %v733, %v733
    %v736 = vmul.f32 %v734, %v734
    %v737 = vsel %vm174, %v735, 0.0
    %738 = vadd.xlane.f32.xlu0 %v737
    %v739 = vpop.xlane.xlu0 %738
    %v740 = vsel %vm174, %v736, 0.0
    %741 = vadd.xlane.f32.xlu0 %v740
    %v742 = vpop.xlane.xlu0 %741
    %v743 = vmul.f32 %v739, %v730
    %v744 = vmul.f32 %v742, %v730
    %v745 = vadd.f32 %v743, 1e-05
    %v746 = vadd.f32 %v744, 1e-05
    %v747 = vrsqrt.pop %v745
    %v748 = vmul.f32 %v747, %v745
    %v749 = vmul.f32 %v748, %v747
    %v750 = vmul.f32 0.5, %v749
    %v751 = vsub.f32 1.5, %v750
    %v752 = vmul.f32 %v747, %v751
    %vm753 = vweird.f32 %v745
    %vm754 = vweird.f32 %v747
    %vm755 = vmor %vm753, %vm754
    %v756 = vsel %vm755, %v747, %v752
    %v757 = vrsqrt.pop %v746
    %v758 = vmul.f32 %v757, %v746
    %v759 = vmul.f32 %v758, %v757
    %v760 = vmul.f32 0.5, %v759
    %v761 = vsub.f32 1.5, %v760
    %v762 = vmul.f32 %v757, %v761
    %vm763 = vweird.f32 %v746
    %vm764 = vweird.f32 %v757
    %vm765 = vmor %vm763, %vm764
    %v766 = vsel %vm765, %v757, %v762
    %v767 = vmul.f32 %v733, %v756
    %v768 = vmul.f32 %v734, %v766
    %v769 = vld [vmem:[%s6] sm:$0x1]
    %v771 = vperm.slane %v769, 0
    %v773 = vmul.f32 %v767, %v771
    %v774 = vmul.f32 %v768, %v771
    %v775 = vld [vmem:[#allocation8] sm:$0x1]
    %v777 = vperm.slane %v775, 0
    %v779 = vadd.f32 %v773, %v777
    %v780 = vadd.f32 %v774, %v777
    %v781 = vpack.c.bf16 %v780, %v779
    %v782 = vld [vmem:[%s8] sm:$0xf]
    %v783 = vld [vmem:[%s8 + $0x4] sm:$0xf]
    %v784 = vld [vmem:[%s8 + $0x8] sm:$0xf]
    %v785 = vld [vmem:[%s8 + $0xc] sm:$0xf]
    %v786 = vld [vmem:[%s9] sm:$0x1]
    %v788 = vperm.slane %v786, 0
    %v794 = vunpack.c.l.b16 %v782
    %v795 = vunpack.c.l.b16 %v783
    %v796 = vunpack.c.l.b16 %v784
    %v797 = vunpack.c.l.b16 %v785
    %v798 = vpack.c.b16 %v795, %v794
    %v799 = vpack.c.b16 %v797, %v796
    %v803 = vsel %vm174, %v781, 0
    %805 = vmatpush.bf16.msra.mxu0 0
    %806 = vmatpush.bf16.msra.mxu0 0
    %807 = vmatpush.bf16.msra.mxu0 0
    %808 = vmatpush.bf16.msra.mxu0 0
    %809 = vmatpush.bf16.msra.mxu0 0
    %810 = vmatpush.bf16.msra.mxu0 0
    %811 = vmatpush.bf16.msra.mxu0 %v799
    %812 = vmatpush.bf16.msra.mxu0 %v798
    %813 = vmatmul.bf16.gmra.mxu0 %v803
    %v814 = vpop.f32.mrf.mxu0
    %v815 = vadd.f32 %v788, %v814
    %v816 = vpop.f32.mrf.mxu0
    %v817 = vadd.f32 %v788, %v816
    %818 = vdwg.mxu0
    %v819 = vmax.f32 %v815, 0.0
    %v820 = vmax.f32 %v817, 0.0
    %v821 = vpack.c.bf16 %v820, %v819
    %v822 = vld [vmem:[%s10] sm:$0xf]
    %v823 = vld [vmem:[%s10 + $0x4] sm:$0xf]
    %v824 = vld [vmem:[%s10 + $0x8] sm:$0xf]
    %v825 = vld [vmem:[%s10 + $0xc] sm:$0xf]
    %v826 = vld [vmem:[%s10 + $0x10] sm:$0xf]
    %v827 = vld [vmem:[%s10 + $0x14] sm:$0xf]
    %v828 = vld [vmem:[%s10 + $0x18] sm:$0xf]
    %v829 = vld [vmem:[%s10 + $0x1c] sm:$0xf]
    %v830 = vld [vmem:[%s11] sm:$0x1]
    %v832 = vperm.slane %v830, 0
    %v842 = vunpack.c.l.b16 %v822
    %v843 = vunpack.c.l.b16 %v823
    %v844 = vunpack.c.l.b16 %v824
    %v845 = vunpack.c.l.b16 %v825
    %v846 = vunpack.c.l.b16 %v826
    %v847 = vunpack.c.l.b16 %v827
    %v848 = vunpack.c.l.b16 %v828
    %v849 = vunpack.c.l.b16 %v829
    %v850 = vpack.c.b16 %v843, %v842
    %v851 = vpack.c.b16 %v845, %v844
    %v852 = vpack.c.b16 %v847, %v846
    %v853 = vpack.c.b16 %v849, %v848
    %vm858 = vcmask 523264
    %v860 = vsel %vm858, %v821, 0
    %862 = vmatpush.bf16.msra.mxu0 0
    %863 = vmatpush.bf16.msra.mxu0 0
    %864 = vmatpush.bf16.msra.mxu0 0
    %865 = vmatpush.bf16.msra.mxu0 0
    %866 = vmatpush.bf16.msra.mxu0 %v853
    %867 = vmatpush.bf16.msra.mxu0 %v852
    %868 = vmatpush.bf16.msra.mxu0 %v851
    %869 = vmatpush.bf16.msra.mxu0 %v850
    %870 = vmatmul.bf16.gmra.mxu0 %v860
    %v871 = vpop.f32.mrf.mxu0
    %v872 = vadd.f32 %v832, %v871
    %v873 = vpop.f32.mrf.mxu0
    %v874 = vadd.f32 %v832, %v873
    %875 = vdwg.mxu0
    %v876 = vadd.f32 %v779, %v872
    %v877 = vadd.f32 %v780, %v874
    %v878 = vsel %vm174, %v876, 0.0
    %879 = vadd.xlane.f32.xlu0 %v878
    %v880 = vpop.xlane.xlu0 %879
    %v881 = vsel %vm174, %v877, 0.0
    %882 = vadd.xlane.f32.xlu0 %v881
    %v883 = vpop.xlane.xlu0 %882
    %v884 = vmul.f32 %v880, %v730
    %v885 = vmul.f32 %v883, %v730
    %v886 = vsub.f32 %v876, %v884
    %v887 = vsub.f32 %v877, %v885
    %v888 = vmul.f32 %v886, %v886
    %v889 = vmul.f32 %v887, %v887
    %v890 = vsel %vm174, %v888, 0.0
    %891 = vadd.xlane.f32.xlu0 %v890
    %v892 = vpop.xlane.xlu0 %891
    %v893 = vsel %vm174, %v889, 0.0
    %894 = vadd.xlane.f32.xlu0 %v893
    %v895 = vpop.xlane.xlu0 %894
    %v896 = vmul.f32 %v892, %v730
    %v897 = vmul.f32 %v895, %v730
    %v898 = vadd.f32 %v896, 1e-05
    %v899 = vadd.f32 %v897, 1e-05
    %v900 = vrsqrt.pop %v898
    %v901 = vmul.f32 %v900, %v898
    %v902 = vmul.f32 %v901, %v900
    %v903 = vmul.f32 0.5, %v902
    %v904 = vsub.f32 1.5, %v903
    %v905 = vmul.f32 %v900, %v904
    %vm906 = vweird.f32 %v898
    %vm907 = vweird.f32 %v900
    %vm908 = vmor %vm906, %vm907
    %v909 = vsel %vm908, %v900, %v905
    %v910 = vrsqrt.pop %v899
    %v911 = vmul.f32 %v910, %v899
    %v912 = vmul.f32 %v911, %v910
    %v913 = vmul.f32 0.5, %v912
    %v914 = vsub.f32 1.5, %v913
    %v915 = vmul.f32 %v910, %v914
    %vm916 = vweird.f32 %v899
    %vm917 = vweird.f32 %v910
    %vm918 = vmor %vm916, %vm917
    %v919 = vsel %vm918, %v910, %v915
    %v920 = vmul.f32 %v886, %v909
    %v921 = vmul.f32 %v887, %v919
    %v922 = vld [vmem:[%s12] sm:$0x1]
    %v924 = vperm.slane %v922, 0
    %v926 = vmul.f32 %v920, %v924
    %v927 = vmul.f32 %v921, %v924
    %v928 = vld [vmem:[#allocation10] sm:$0x1]
    %v930 = vperm.slane %v928, 0
    %v932 = vadd.f32 %v926, %v930
    %v933 = vadd.f32 %v927, %v930
    %v934 = vpack.c.bf16 %v933, %v932
    %s935 = scalar_lea.vmem %s2, 16
    %v936 = vld [vmem:[%s935] sm:$0xf]
    %v937 = vld [vmem:[%s935 + $0x4] sm:$0xf]
    %v938 = vld [vmem:[%s935 + $0x8] sm:$0xf]
    %v939 = vld [vmem:[%s935 + $0xc] sm:$0xf]
    %s940 = scalar_lea.vmem [#allocation7], 1
    %v941 = vld [vmem:[%s940] sm:$0x1]
    %v943 = vperm.slane %v941, 0
    %v949 = vunpack.c.l.b16 %v936
    %v950 = vunpack.c.l.b16 %v937
    %v951 = vunpack.c.l.b16 %v938
    %v952 = vunpack.c.l.b16 %v939
    %v953 = vpack.c.b16 %v950, %v949
    %v954 = vpack.c.b16 %v952, %v951
    %v958 = vsel %vm174, %v934, 0
    %960 = vmatpush.bf16.msra.mxu0 0
    %961 = vmatpush.bf16.msra.mxu0 0
    %962 = vmatpush.bf16.msra.mxu0 0
    %963 = vmatpush.bf16.msra.mxu0 0
    %964 = vmatpush.bf16.msra.mxu0 0
    %965 = vmatpush.bf16.msra.mxu0 0
    %966 = vmatpush.bf16.msra.mxu0 %v954
    %967 = vmatpush.bf16.msra.mxu0 %v953
    %968 = vmatmul.bf16.gmra.mxu0 %v958
    %v969 = vpop.f32.mrf.mxu0
    %v970 = vadd.f32 %v943, %v969
    %v971 = vpop.f32.mrf.mxu0
    %v972 = vadd.f32 %v943, %v971
    %973 = vdwg.mxu0
    %v974 = vpack.c.bf16 %v970, %v970
    %v975 = vpack.c.bf16 %v972, %v972
    %v977 = vunpack.c.l.b16 %v974
    %v978 = vpack.c.b16 %v977, %v977
    %979 = vrot.lane.b32.xlu0 %v978, 96
    %v980 = vpop.permute.xlu0 %979
    %v982 = vsel %vm199, %v974, 0
    %v985 = vsel %vm199, %v980, 0
    %987 = vmatpush.bf16.xpose.msra.mxu0 0
    %988 = vmatpush.bf16.xpose.msra.mxu0 0
    %989 = vmatpush.bf16.xpose.msra.mxu0 0
    %990 = vmatpush.bf16.xpose.msra.mxu0 0
    %991 = vmatpush.bf16.xpose.msra.mxu0 0
    %992 = vmatpush.bf16.xpose.msra.mxu0 0
    %993 = vmatpush.bf16.xpose.msra.mxu0 0
    %994 = vmatpush.bf16.xpose.msra.mxu0 %v985
    %995 = vmatmul.bf16.gmra.mxu0 %v982
    %v996 = vpop.f32.mrf.mxu0
    %v997 = vadd.f32 %v149, %v996
    %v998 = vpop.f32.mrf.mxu0
    %999 = vdwg.mxu0
    %v1001 = vunpack.c.l.b16 %v975
    %v1002 = vpack.c.b16 %v1001, %v1001
    %1003 = vrot.lane.b32.xlu0 %v1002, 96
    %v1004 = vpop.permute.xlu0 %1003
    %v1006 = vsel %vm199, %v975, 0
    %v1009 = vsel %vm199, %v1004, 0
    %1011 = vmatpush.bf16.xpose.msra.mxu0 0
    %1012 = vmatpush.bf16.xpose.msra.mxu0 0
    %1013 = vmatpush.bf16.xpose.msra.mxu0 0
    %1014 = vmatpush.bf16.xpose.msra.mxu0 0
    %1015 = vmatpush.bf16.xpose.msra.mxu0 0
    %1016 = vmatpush.bf16.xpose.msra.mxu0 0
    %1017 = vmatpush.bf16.xpose.msra.mxu0 0
    %1018 = vmatpush.bf16.xpose.msra.mxu0 %v1009
    %1019 = vmatmul.bf16.gmra.mxu0 %v1006
    %v1020 = vpop.f32.mrf.mxu0
    %v1021 = vadd.f32 %v150, %v1020
    %v1022 = vpop.f32.mrf.mxu0
    %1023 = vdwg.mxu0
    %v1024 = vsel %vm199, %v997, -inf
    %1025 = vmax.xlane.f32.xlu0 %v1024
    %v1026 = vpop.xlane.xlu0 %1025
    %v1027 = vsel %vm199, %v1021, -inf
    %1028 = vmax.xlane.f32.xlu0 %v1027
    %v1029 = vpop.xlane.xlu0 %1028
    %v1030 = vsub.f32 %v997, %v1026
    %v1031 = vsub.f32 %v1021, %v1029
    %v1032 = vmul.f32 %v1030, 1.442695
    %v1033 = vpow.pop %v1032
    %v1034 = vmul.f32 %v1031, 1.442695
    %v1035 = vpow.pop %v1034
    %v1036 = vsel %vm199, %v1033, 0.0
    %1037 = vadd.xlane.f32.xlu0 %v1036
    %v1038 = vpop.xlane.xlu0 %1037
    %v1039 = vsel %vm199, %v1035, 0.0
    %1040 = vadd.xlane.f32.xlu0 %v1039
    %v1041 = vpop.xlane.xlu0 %1040
    %v1042 = vrcp.pop %v1038
    %v1043 = vrcp.pop %v1041
    %v1044 = vmul.f32 %v1033, %v1042
    %v1045 = vmul.f32 %v1035, %v1043
    %v1046 = vpack.c.bf16 %v1044, %v1044
    %v1047 = vpack.c.bf16 %v1045, %v1045
    %1048 = vrot.lane.b32.xlu0 %v978, 64
    %v1049 = vpop.permute.xlu0 %1048
    %v1051 = vsel %vm199, %v1046, 0
    %v1054 = vsel %vm272, %v1049, 0
    %1056 = vmatpush.bf16.msra.mxu0 0
    %1057 = vmatpush.bf16.msra.mxu0 0
    %1058 = vmatpush.bf16.msra.mxu0 0
    %1059 = vmatpush.bf16.msra.mxu0 0
    %1060 = vmatpush.bf16.msra.mxu0 0
    %1061 = vmatpush.bf16.msra.mxu0 0
    %1062 = vmatpush.bf16.msra.mxu0 0
    %1063 = vmatpush.bf16.msra.mxu0 %v1054
    %1064 = vmatmul.bf16.gmra.mxu0 %v1051
    %v1065 = vpop.f32.mrf.mxu0
    %v1066 = vadd.f32 0.0, %v1065
    %v1067 = vpop.f32.mrf.mxu0
    %1068 = vdwg.mxu0
    %1069 = vrot.lane.b32.xlu0 %v1002, 64
    %v1070 = vpop.permute.xlu0 %1069
    %v1072 = vsel %vm199, %v1047, 0
    %v1075 = vsel %vm272, %v1070, 0
    %1077 = vmatpush.bf16.msra.mxu0 0
    %1078 = vmatpush.bf16.msra.mxu0 0
    %1079 = vmatpush.bf16.msra.mxu0 0
    %1080 = vmatpush.bf16.msra.mxu0 0
    %1081 = vmatpush.bf16.msra.mxu0 0
    %1082 = vmatpush.bf16.msra.mxu0 0
    %1083 = vmatpush.bf16.msra.mxu0 0
    %1084 = vmatpush.bf16.msra.mxu0 %v1075
    %1085 = vmatmul.bf16.gmra.mxu0 %v1072
    %v1086 = vpop.f32.mrf.mxu0
    %v1087 = vadd.f32 0.0, %v1086
    %v1088 = vpop.f32.mrf.mxu0
    %1089 = vdwg.mxu0
    %1090 = vrot.lane.b32.xlu0 %v978, 120
    %v1091 = vpop.permute.xlu0 %1090
    %1092 = vrot.lane.b32.xlu0 %v978, 88
    %v1093 = vpop.permute.xlu0 %1092
    %v1095 = vsel %vm199, %v1091, 0
    %v1098 = vsel %vm199, %v1093, 0
    %1100 = vmatpush.bf16.xpose.msra.mxu0 0
    %1101 = vmatpush.bf16.xpose.msra.mxu0 0
    %1102 = vmatpush.bf16.xpose.msra.mxu0 0
    %1103 = vmatpush.bf16.xpose.msra.mxu0 0
    %1104 = vmatpush.bf16.xpose.msra.mxu0 0
    %1105 = vmatpush.bf16.xpose.msra.mxu0 0
    %1106 = vmatpush.bf16.xpose.msra.mxu0 0
    %1107 = vmatpush.bf16.xpose.msra.mxu0 %v1098
    %1108 = vmatmul.bf16.gmra.mxu0 %v1095
    %v1109 = vpop.f32.mrf.mxu0
    %v1110 = vadd.f32 %v149, %v1109
    %v1111 = vpop.f32.mrf.mxu0
    %1112 = vdwg.mxu0
    %1113 = vrot.lane.b32.xlu0 %v1002, 120
    %v1114 = vpop.permute.xlu0 %1113
    %1115 = vrot.lane.b32.xlu0 %v1002, 88
    %v1116 = vpop.permute.xlu0 %1115
    %v1118 = vsel %vm199, %v1114, 0
    %v1121 = vsel %vm199, %v1116, 0
    %1123 = vmatpush.bf16.xpose.msra.mxu0 0
    %1124 = vmatpush.bf16.xpose.msra.mxu0 0
    %1125 = vmatpush.bf16.xpose.msra.mxu0 0
    %1126 = vmatpush.bf16.xpose.msra.mxu0 0
    %1127 = vmatpush.bf16.xpose.msra.mxu0 0
    %1128 = vmatpush.bf16.xpose.msra.mxu0 0
    %1129 = vmatpush.bf16.xpose.msra.mxu0 0
    %1130 = vmatpush.bf16.xpose.msra.mxu0 %v1121
    %1131 = vmatmul.bf16.gmra.mxu0 %v1118
    %v1132 = vpop.f32.mrf.mxu0
    %v1133 = vadd.f32 %v150, %v1132
    %v1134 = vpop.f32.mrf.mxu0
    %1135 = vdwg.mxu0
    %v1136 = vsel %vm199, %v1110, -inf
    %1137 = vmax.xlane.f32.xlu0 %v1136
    %v1138 = vpop.xlane.xlu0 %1137
    %v1139 = vsel %vm199, %v1133, -inf
    %1140 = vmax.xlane.f32.xlu0 %v1139
    %v1141 = vpop.xlane.xlu0 %1140
    %v1142 = vsub.f32 %v1110, %v1138
    %v1143 = vsub.f32 %v1133, %v1141
    %v1144 = vmul.f32 %v1142, 1.442695
    %v1145 = vpow.pop %v1144
    %v1146 = vmul.f32 %v1143, 1.442695
    %v1147 = vpow.pop %v1146
    %v1148 = vsel %vm199, %v1145, 0.0
    %1149 = vadd.xlane.f32.xlu0 %v1148
    %v1150 = vpop.xlane.xlu0 %1149
    %v1151 = vsel %vm199, %v1147, 0.0
    %1152 = vadd.xlane.f32.xlu0 %v1151
    %v1153 = vpop.xlane.xlu0 %1152
    %v1154 = vrcp.pop %v1150
    %v1155 = vrcp.pop %v1153
    %v1156 = vmul.f32 %v1145, %v1154
    %v1157 = vmul.f32 %v1147, %v1155
    %v1158 = vpack.c.bf16 %v1156, %v1156
    %v1159 = vpack.c.bf16 %v1157, %v1157
    %1160 = vrot.lane.b32.xlu0 %v978, 56
    %v1161 = vpop.permute.xlu0 %1160
    %v1163 = vsel %vm199, %v1158, 0
    %v1166 = vsel %vm272, %v1161, 0
    %1168 = vmatpush.bf16.msra.mxu0 0
    %1169 = vmatpush.bf16.msra.mxu0 0
    %1170 = vmatpush.bf16.msra.mxu0 0
    %1171 = vmatpush.bf16.msra.mxu0 0
    %1172 = vmatpush.bf16.msra.mxu0 0
    %1173 = vmatpush.bf16.msra.mxu0 0
    %1174 = vmatpush.bf16.msra.mxu0 0
    %1175 = vmatpush.bf16.msra.mxu0 %v1166
    %1176 = vmatmul.bf16.gmra.mxu0 %v1163
    %v1177 = vpop.f32.mrf.mxu0
    %v1178 = vadd.f32 0.0, %v1177
    %v1179 = vpop.f32.mrf.mxu0
    %1180 = vdwg.mxu0
    %1181 = vrot.lane.b32.xlu0 %v1002, 56
    %v1182 = vpop.permute.xlu0 %1181
    %v1184 = vsel %vm199, %v1159, 0
    %v1187 = vsel %vm272, %v1182, 0
    %1189 = vmatpush.bf16.msra.mxu0 0
    %1190 = vmatpush.bf16.msra.mxu0 0
    %1191 = vmatpush.bf16.msra.mxu0 0
    %1192 = vmatpush.bf16.msra.mxu0 0
    %1193 = vmatpush.bf16.msra.mxu0 0
    %1194 = vmatpush.bf16.msra.mxu0 0
    %1195 = vmatpush.bf16.msra.mxu0 0
    %1196 = vmatpush.bf16.msra.mxu0 %v1187
    %1197 = vmatmul.bf16.gmra.mxu0 %v1184
    %v1198 = vpop.f32.mrf.mxu0
    %v1199 = vadd.f32 0.0, %v1198
    %v1200 = vpop.f32.mrf.mxu0
    %1201 = vdwg.mxu0
    %1202 = vrot.lane.b32.xlu0 %v978, 112
    %v1203 = vpop.permute.xlu0 %1202
    %1204 = vrot.lane.b32.xlu0 %v978, 80
    %v1205 = vpop.permute.xlu0 %1204
    %v1207 = vsel %vm199, %v1203, 0
    %v1210 = vsel %vm199, %v1205, 0
    %1212 = vmatpush.bf16.xpose.msra.mxu0 0
    %1213 = vmatpush.bf16.xpose.msra.mxu0 0
    %1214 = vmatpush.bf16.xpose.msra.mxu0 0
    %1215 = vmatpush.bf16.xpose.msra.mxu0 0
    %1216 = vmatpush.bf16.xpose.msra.mxu0 0
    %1217 = vmatpush.bf16.xpose.msra.mxu0 0
    %1218 = vmatpush.bf16.xpose.msra.mxu0 0
    %1219 = vmatpush.bf16.xpose.msra.mxu0 %v1210
    %1220 = vmatmul.bf16.gmra.mxu0 %v1207
    %v1221 = vpop.f32.mrf.mxu0
    %v1222 = vadd.f32 %v149, %v1221
    %v1223 = vpop.f32.mrf.mxu0
    %1224 = vdwg.mxu0
    %1225 = vrot.lane.b32.xlu0 %v1002, 112
    %v1226 = vpop.permute.xlu0 %1225
    %1227 = vrot.lane.b32.xlu0 %v1002, 80
    %v1228 = vpop.permute.xlu0 %1227
    %v1230 = vsel %vm199, %v1226, 0
    %v1233 = vsel %vm199, %v1228, 0
    %1235 = vmatpush.bf16.xpose.msra.mxu0 0
    %1236 = vmatpush.bf16.xpose.msra.mxu0 0
    %1237 = vmatpush.bf16.xpose.msra.mxu0 0
    %1238 = vmatpush.bf16.xpose.msra.mxu0 0
    %1239 = vmatpush.bf16.xpose.msra.mxu0 0
    %1240 = vmatpush.bf16.xpose.msra.mxu0 0
    %1241 = vmatpush.bf16.xpose.msra.mxu0 0
    %1242 = vmatpush.bf16.xpose.msra.mxu0 %v1233
    %1243 = vmatmul.bf16.gmra.mxu0 %v1230
    %v1244 = vpop.f32.mrf.mxu0
    %v1245 = vadd.f32 %v150, %v1244
    %v1246 = vpop.f32.mrf.mxu0
    %1247 = vdwg.mxu0
    %v1248 = vsel %vm199, %v1222, -inf
    %1249 = vmax.xlane.f32.xlu0 %v1248
    %v1250 = vpop.xlane.xlu0 %1249
    %v1251 = vsel %vm199, %v1245, -inf
    %1252 = vmax.xlane.f32.xlu0 %v1251
    %v1253 = vpop.xlane.xlu0 %1252
    %v1254 = vsub.f32 %v1222, %v1250
    %v1255 = vsub.f32 %v1245, %v1253
    %v1256 = vmul.f32 %v1254, 1.442695
    %v1257 = vpow.pop %v1256
    %v1258 = vmul.f32 %v1255, 1.442695
    %v1259 = vpow.pop %v1258
    %v1260 = vsel %vm199, %v1257, 0.0
    %1261 = vadd.xlane.f32.xlu0 %v1260
    %v1262 = vpop.xlane.xlu0 %1261
    %v1263 = vsel %vm199, %v1259, 0.0
    %1264 = vadd.xlane.f32.xlu0 %v1263
    %v1265 = vpop.xlane.xlu0 %1264
    %v1266 = vrcp.pop %v1262
    %v1267 = vrcp.pop %v1265
    %v1268 = vmul.f32 %v1257, %v1266
    %v1269 = vmul.f32 %v1259, %v1267
    %v1270 = vpack.c.bf16 %v1268, %v1268
    %v1271 = vpack.c.bf16 %v1269, %v1269
    %1272 = vrot.lane.b32.xlu0 %v978, 48
    %v1273 = vpop.permute.xlu0 %1272
    %v1275 = vsel %vm199, %v1270, 0
    %v1278 = vsel %vm272, %v1273, 0
    %1280 = vmatpush.bf16.msra.mxu0 0
    %1281 = vmatpush.bf16.msra.mxu0 0
    %1282 = vmatpush.bf16.msra.mxu0 0
    %1283 = vmatpush.bf16.msra.mxu0 0
    %1284 = vmatpush.bf16.msra.mxu0 0
    %1285 = vmatpush.bf16.msra.mxu0 0
    %1286 = vmatpush.bf16.msra.mxu0 0
    %1287 = vmatpush.bf16.msra.mxu0 %v1278
    %1288 = vmatmul.bf16.gmra.mxu0 %v1275
    %v1289 = vpop.f32.mrf.mxu0
    %v1290 = vadd.f32 0.0, %v1289
    %v1291 = vpop.f32.mrf.mxu0
    %1292 = vdwg.mxu0
    %1293 = vrot.lane.b32.xlu0 %v1002, 48
    %v1294 = vpop.permute.xlu0 %1293
    %v1296 = vsel %vm199, %v1271, 0
    %v1299 = vsel %vm272, %v1294, 0
    %1301 = vmatpush.bf16.msra.mxu0 0
    %1302 = vmatpush.bf16.msra.mxu0 0
    %1303 = vmatpush.bf16.msra.mxu0 0
    %1304 = vmatpush.bf16.msra.mxu0 0
    %1305 = vmatpush.bf16.msra.mxu0 0
    %1306 = vmatpush.bf16.msra.mxu0 0
    %1307 = vmatpush.bf16.msra.mxu0 0
    %1308 = vmatpush.bf16.msra.mxu0 %v1299
    %1309 = vmatmul.bf16.gmra.mxu0 %v1296
    %v1310 = vpop.f32.mrf.mxu0
    %v1311 = vadd.f32 0.0, %v1310
    %v1312 = vpop.f32.mrf.mxu0
    %1313 = vdwg.mxu0
    %1314 = vrot.lane.b32.xlu0 %v978, 104
    %v1315 = vpop.permute.xlu0 %1314
    %1316 = vrot.lane.b32.xlu0 %v978, 72
    %v1317 = vpop.permute.xlu0 %1316
    %v1319 = vsel %vm199, %v1315, 0
    %v1322 = vsel %vm199, %v1317, 0
    %1324 = vmatpush.bf16.xpose.msra.mxu0 0
    %1325 = vmatpush.bf16.xpose.msra.mxu0 0
    %1326 = vmatpush.bf16.xpose.msra.mxu0 0
    %1327 = vmatpush.bf16.xpose.msra.mxu0 0
    %1328 = vmatpush.bf16.xpose.msra.mxu0 0
    %1329 = vmatpush.bf16.xpose.msra.mxu0 0
    %1330 = vmatpush.bf16.xpose.msra.mxu0 0
    %1331 = vmatpush.bf16.xpose.msra.mxu0 %v1322
    %1332 = vmatmul.bf16.gmra.mxu0 %v1319
    %v1333 = vpop.f32.mrf.mxu0
    %v1334 = vadd.f32 %v149, %v1333
    %v1335 = vpop.f32.mrf.mxu0
    %1336 = vdwg.mxu0
    %1337 = vrot.lane.b32.xlu0 %v1002, 104
    %v1338 = vpop.permute.xlu0 %1337
    %1339 = vrot.lane.b32.xlu0 %v1002, 72
    %v1340 = vpop.permute.xlu0 %1339
    %v1342 = vsel %vm199, %v1338, 0
    %v1345 = vsel %vm199, %v1340, 0
    %1347 = vmatpush.bf16.xpose.msra.mxu0 0
    %1348 = vmatpush.bf16.xpose.msra.mxu0 0
    %1349 = vmatpush.bf16.xpose.msra.mxu0 0
    %1350 = vmatpush.bf16.xpose.msra.mxu0 0
    %1351 = vmatpush.bf16.xpose.msra.mxu0 0
    %1352 = vmatpush.bf16.xpose.msra.mxu0 0
    %1353 = vmatpush.bf16.xpose.msra.mxu0 0
    %1354 = vmatpush.bf16.xpose.msra.mxu0 %v1345
    %1355 = vmatmul.bf16.gmra.mxu0 %v1342
    %v1356 = vpop.f32.mrf.mxu0
    %v1357 = vadd.f32 %v150, %v1356
    %v1358 = vpop.f32.mrf.mxu0
    %1359 = vdwg.mxu0
    %v1360 = vsel %vm199, %v1334, -inf
    %1361 = vmax.xlane.f32.xlu0 %v1360
    %v1362 = vpop.xlane.xlu0 %1361
    %v1363 = vsel %vm199, %v1357, -inf
    %1364 = vmax.xlane.f32.xlu0 %v1363
    %v1365 = vpop.xlane.xlu0 %1364
    %v1366 = vsub.f32 %v1334, %v1362
    %v1367 = vsub.f32 %v1357, %v1365
    %v1368 = vmul.f32 %v1366, 1.442695
    %v1369 = vpow.pop %v1368
    %v1370 = vmul.f32 %v1367, 1.442695
    %v1371 = vpow.pop %v1370
    %v1372 = vsel %vm199, %v1369, 0.0
    %1373 = vadd.xlane.f32.xlu0 %v1372
    %v1374 = vpop.xlane.xlu0 %1373
    %v1375 = vsel %vm199, %v1371, 0.0
    %1376 = vadd.xlane.f32.xlu0 %v1375
    %v1377 = vpop.xlane.xlu0 %1376
    %v1378 = vrcp.pop %v1374
    %v1379 = vrcp.pop %v1377
    %v1380 = vmul.f32 %v1369, %v1378
    %v1381 = vmul.f32 %v1371, %v1379
    %v1382 = vpack.c.bf16 %v1380, %v1380
    %v1383 = vpack.c.bf16 %v1381, %v1381
    %1384 = vrot.lane.b32.xlu0 %v978, 40
    %v1385 = vpop.permute.xlu0 %1384
    %v1387 = vsel %vm199, %v1382, 0
    %v1390 = vsel %vm272, %v1385, 0
    %1392 = vmatpush.bf16.msra.mxu0 0
    %1393 = vmatpush.bf16.msra.mxu0 0
    %1394 = vmatpush.bf16.msra.mxu0 0
    %1395 = vmatpush.bf16.msra.mxu0 0
    %1396 = vmatpush.bf16.msra.mxu0 0
    %1397 = vmatpush.bf16.msra.mxu0 0
    %1398 = vmatpush.bf16.msra.mxu0 0
    %1399 = vmatpush.bf16.msra.mxu0 %v1390
    %1400 = vmatmul.bf16.gmra.mxu0 %v1387
    %v1401 = vpop.f32.mrf.mxu0
    %v1402 = vadd.f32 0.0, %v1401
    %v1403 = vpop.f32.mrf.mxu0
    %1404 = vdwg.mxu0
    %1405 = vrot.lane.b32.xlu0 %v1002, 40
    %v1406 = vpop.permute.xlu0 %1405
    %v1408 = vsel %vm199, %v1383, 0
    %v1411 = vsel %vm272, %v1406, 0
    %1413 = vmatpush.bf16.msra.mxu0 0
    %1414 = vmatpush.bf16.msra.mxu0 0
    %1415 = vmatpush.bf16.msra.mxu0 0
    %1416 = vmatpush.bf16.msra.mxu0 0
    %1417 = vmatpush.bf16.msra.mxu0 0
    %1418 = vmatpush.bf16.msra.mxu0 0
    %1419 = vmatpush.bf16.msra.mxu0 0
    %1420 = vmatpush.bf16.msra.mxu0 %v1411
    %1421 = vmatmul.bf16.gmra.mxu0 %v1408
    %v1422 = vpop.f32.mrf.mxu0
    %v1423 = vadd.f32 0.0, %v1422
    %v1424 = vpop.f32.mrf.mxu0
    %1425 = vdwg.mxu0
    %1428 = vrot.lane.b32.xlu0 %v1178, 8
    %v1429 = vpop.permute.xlu0 %1428
    %1430 = vrot.lane.b32.xlu0 %v1199, 8
    %v1431 = vpop.permute.xlu0 %1430
    %1436 = vrot.lane.b32.xlu0 %v1290, 16
    %v1437 = vpop.permute.xlu0 %1436
    %1438 = vrot.lane.b32.xlu0 %v1311, 16
    %v1439 = vpop.permute.xlu0 %1438
    %1444 = vrot.lane.b32.xlu0 %v1402, 24
    %v1445 = vpop.permute.xlu0 %1444
    %1446 = vrot.lane.b32.xlu0 %v1423, 24
    %v1447 = vpop.permute.xlu0 %1446
    %v1450 = vsel %vm199, %v1066, %v1429
    %v1451 = vsel %vm199, %v1087, %v1431
    %v1452 = vsel %vm672, %v1450, %v1437
    %v1453 = vsel %vm672, %v1451, %v1439
    %v1454 = vsel %vm675, %v1452, %v1445
    %v1455 = vsel %vm675, %v1453, %v1447
    %v1456 = vpack.c.bf16 %v1455, %v1454
    %s1457 = scalar_lea.vmem %s4, 16
    %v1458 = vld [vmem:[%s1457] sm:$0xf]
    %v1459 = vld [vmem:[%s1457 + $0x4] sm:$0xf]
    %v1460 = vld [vmem:[%s1457 + $0x8] sm:$0xf]
    %v1461 = vld [vmem:[%s1457 + $0xc] sm:$0xf]
    %s1462 = scalar_lea.vmem %s5, 1
    %v1463 = vld [vmem:[%s1462] sm:$0x1]
    %v1465 = vperm.slane %v1463, 0
    %v1471 = vunpack.c.l.b16 %v1458
    %v1472 = vunpack.c.l.b16 %v1459
    %v1473 = vunpack.c.l.b16 %v1460
    %v1474 = vunpack.c.l.b16 %v1461
    %v1475 = vpack.c.b16 %v1472, %v1471
    %v1476 = vpack.c.b16 %v1474, %v1473
    %v1480 = vsel %vm174, %v1456, 0
    %1482 = vmatpush.bf16.msra.mxu0 0
    %1483 = vmatpush.bf16.msra.mxu0 0
    %1484 = vmatpush.bf16.msra.mxu0 0
    %1485 = vmatpush.bf16.msra.mxu0 0
    %1486 = vmatpush.bf16.msra.mxu0 0
    %1487 = vmatpush.bf16.msra.mxu0 0
    %1488 = vmatpush.bf16.msra.mxu0 %v1476
    %1489 = vmatpush.bf16.msra.mxu0 %v1475
    %1490 = vmatmul.bf16.gmra.mxu0 %v1480
    %v1491 = vpop.f32.mrf.mxu0
    %v1492 = vadd.f32 %v1465, %v1491
    %v1493 = vpop.f32.mrf.mxu0
    %v1494 = vadd.f32 %v1465, %v1493
    %1495 = vdwg.mxu0
    %v1496 = vadd.f32 %v932, %v1492
    %v1497 = vadd.f32 %v933, %v1494
    %v1498 = vsel %vm174, %v1496, 0.0
    %1499 = vadd.xlane.f32.xlu0 %v1498
    %v1500 = vpop.xlane.xlu0 %1499
    %v1501 = vsel %vm174, %v1497, 0.0
    %1502 = vadd.xlane.f32.xlu0 %v1501
    %v1503 = vpop.xlane.xlu0 %1502
    %v1504 = vmul.f32 %v1500, %v730
    %v1505 = vmul.f32 %v1503, %v730
    %v1506 = vsub.f32 %v1496, %v1504
    %v1507 = vsub.f32 %v1497, %v1505
    %v1508 = vmul.f32 %v1506, %v1506
    %v1509 = vmul.f32 %v1507, %v1507
    %v1510 = vsel %vm174, %v1508, 0.0
    %1511 = vadd.xlane.f32.xlu0 %v1510
    %v1512 = vpop.xlane.xlu0 %1511
    %v1513 = vsel %vm174, %v1509, 0.0
    %1514 = vadd.xlane.f32.xlu0 %v1513
    %v1515 = vpop.xlane.xlu0 %1514
    %v1516 = vmul.f32 %v1512, %v730
    %v1517 = vmul.f32 %v1515, %v730
    %v1518 = vadd.f32 %v1516, 1e-05
    %v1519 = vadd.f32 %v1517, 1e-05
    %v1520 = vrsqrt.pop %v1518
    %v1521 = vmul.f32 %v1520, %v1518
    %v1522 = vmul.f32 %v1521, %v1520
    %v1523 = vmul.f32 0.5, %v1522
    %v1524 = vsub.f32 1.5, %v1523
    %v1525 = vmul.f32 %v1520, %v1524
    %vm1526 = vweird.f32 %v1518
    %vm1527 = vweird.f32 %v1520
    %vm1528 = vmor %vm1526, %vm1527
    %v1529 = vsel %vm1528, %v1520, %v1525
    %v1530 = vrsqrt.pop %v1519
    %v1531 = vmul.f32 %v1530, %v1519
    %v1532 = vmul.f32 %v1531, %v1530
    %v1533 = vmul.f32 0.5, %v1532
    %v1534 = vsub.f32 1.5, %v1533
    %v1535 = vmul.f32 %v1530, %v1534
    %vm1536 = vweird.f32 %v1519
    %vm1537 = vweird.f32 %v1530
    %vm1538 = vmor %vm1536, %vm1537
    %v1539 = vsel %vm1538, %v1530, %v1535
    %v1540 = vmul.f32 %v1506, %v1529
    %v1541 = vmul.f32 %v1507, %v1539
    %s1542 = scalar_lea.vmem %s6, 1
    %v1543 = vld [vmem:[%s1542] sm:$0x1]
    %v1545 = vperm.slane %v1543, 0
    %v1547 = vmul.f32 %v1540, %v1545
    %v1548 = vmul.f32 %v1541, %v1545
    %s1549 = scalar_lea.vmem [#allocation8], 1
    %v1550 = vld [vmem:[%s1549] sm:$0x1]
    %v1552 = vperm.slane %v1550, 0
    %v1554 = vadd.f32 %v1547, %v1552
    %v1555 = vadd.f32 %v1548, %v1552
    %v1556 = vpack.c.bf16 %v1555, %v1554
    %s1557 = scalar_lea.vmem %s8, 16
    %v1558 = vld [vmem:[%s1557] sm:$0xf]
    %v1559 = vld [vmem:[%s1557 + $0x4] sm:$0xf]
    %v1560 = vld [vmem:[%s1557 + $0x8] sm:$0xf]
    %v1561 = vld [vmem:[%s1557 + $0xc] sm:$0xf]
    %s1562 = scalar_lea.vmem %s9, 1
    %v1563 = vld [vmem:[%s1562] sm:$0x1]
    %v1565 = vperm.slane %v1563, 0
    %v1571 = vunpack.c.l.b16 %v1558
    %v1572 = vunpack.c.l.b16 %v1559
    %v1573 = vunpack.c.l.b16 %v1560
    %v1574 = vunpack.c.l.b16 %v1561
    %v1575 = vpack.c.b16 %v1572, %v1571
    %v1576 = vpack.c.b16 %v1574, %v1573
    %v1580 = vsel %vm174, %v1556, 0
    %1582 = vmatpush.bf16.msra.mxu0 0
    %1583 = vmatpush.bf16.msra.mxu0 0
    %1584 = vmatpush.bf16.msra.mxu0 0
    %1585 = vmatpush.bf16.msra.mxu0 0
    %1586 = vmatpush.bf16.msra.mxu0 0
    %1587 = vmatpush.bf16.msra.mxu0 0
    %1588 = vmatpush.bf16.msra.mxu0 %v1576
    %1589 = vmatpush.bf16.msra.mxu0 %v1575
    %1590 = vmatmul.bf16.gmra.mxu0 %v1580
    %v1591 = vpop.f32.mrf.mxu0
    %v1592 = vadd.f32 %v1565, %v1591
    %v1593 = vpop.f32.mrf.mxu0
    %v1594 = vadd.f32 %v1565, %v1593
    %1595 = vdwg.mxu0
    %v1596 = vmax.f32 %v1592, 0.0
    %v1597 = vmax.f32 %v1594, 0.0
    %v1598 = vpack.c.bf16 %v1597, %v1596
    %s1599 = scalar_lea.vmem %s10, 32
    %v1600 = vld [vmem:[%s1599] sm:$0xf]
    %v1601 = vld [vmem:[%s1599 + $0x4] sm:$0xf]
    %v1602 = vld [vmem:[%s1599 + $0x8] sm:$0xf]
    %v1603 = vld [vmem:[%s1599 + $0xc] sm:$0xf]
    %v1604 = vld [vmem:[%s1599 + $0x10] sm:$0xf]
    %v1605 = vld [vmem:[%s1599 + $0x14] sm:$0xf]
    %v1606 = vld [vmem:[%s1599 + $0x18] sm:$0xf]
    %v1607 = vld [vmem:[%s1599 + $0x1c] sm:$0xf]
    %s1608 = scalar_lea.vmem %s11, 1
    %v1609 = vld [vmem:[%s1608] sm:$0x1]
    %v1611 = vperm.slane %v1609, 0
    %v1621 = vunpack.c.l.b16 %v1600
    %v1622 = vunpack.c.l.b16 %v1601
    %v1623 = vunpack.c.l.b16 %v1602
    %v1624 = vunpack.c.l.b16 %v1603
    %v1625 = vunpack.c.l.b16 %v1604
    %v1626 = vunpack.c.l.b16 %v1605
    %v1627 = vunpack.c.l.b16 %v1606
    %v1628 = vunpack.c.l.b16 %v1607
    %v1629 = vpack.c.b16 %v1622, %v1621
    %v1630 = vpack.c.b16 %v1624, %v1623
    %v1631 = vpack.c.b16 %v1626, %v1625
    %v1632 = vpack.c.b16 %v1628, %v1627
    %v1638 = vsel %vm858, %v1598, 0
    %1640 = vmatpush.bf16.msra.mxu0 0
    %1641 = vmatpush.bf16.msra.mxu0 0
    %1642 = vmatpush.bf16.msra.mxu0 0
    %1643 = vmatpush.bf16.msra.mxu0 0
    %1644 = vmatpush.bf16.msra.mxu0 %v1632
    %1645 = vmatpush.bf16.msra.mxu0 %v1631
    %1646 = vmatpush.bf16.msra.mxu0 %v1630
    %1647 = vmatpush.bf16.msra.mxu0 %v1629
    %1648 = vmatmul.bf16.gmra.mxu0 %v1638
    %v1649 = vpop.f32.mrf.mxu0
    %v1650 = vadd.f32 %v1611, %v1649
    %v1651 = vpop.f32.mrf.mxu0
    %v1652 = vadd.f32 %v1611, %v1651
    %1653 = vdwg.mxu0
    %v1654 = vadd.f32 %v1554, %v1650
    %v1655 = vadd.f32 %v1555, %v1652
    %v1656 = vsel %vm174, %v1654, 0.0
    %1657 = vadd.xlane.f32.xlu0 %v1656
    %v1658 = vpop.xlane.xlu0 %1657
    %v1659 = vsel %vm174, %v1655, 0.0
    %1660 = vadd.xlane.f32.xlu0 %v1659
    %v1661 = vpop.xlane.xlu0 %1660
    %v1662 = vmul.f32 %v1658, %v730
    %v1663 = vmul.f32 %v1661, %v730
    %v1664 = vsub.f32 %v1654, %v1662
    %v1665 = vsub.f32 %v1655, %v1663
    %v1666 = vmul.f32 %v1664, %v1664
    %v1667 = vmul.f32 %v1665, %v1665
    %v1668 = vsel %vm174, %v1666, 0.0
    %1669 = vadd.xlane.f32.xlu0 %v1668
    %v1670 = vpop.xlane.xlu0 %1669
    %v1671 = vsel %vm174, %v1667, 0.0
    %1672 = vadd.xlane.f32.xlu0 %v1671
    %v1673 = vpop.xlane.xlu0 %1672
    %v1674 = vmul.f32 %v1670, %v730
    %v1675 = vmul.f32 %v1673, %v730
    %v1676 = vadd.f32 %v1674, 1e-05
    %v1677 = vadd.f32 %v1675, 1e-05
    %v1678 = vrsqrt.pop %v1676
    %v1679 = vmul.f32 %v1678, %v1676
    %v1680 = vmul.f32 %v1679, %v1678
    %v1681 = vmul.f32 0.5, %v1680
    %v1682 = vsub.f32 1.5, %v1681
    %v1683 = vmul.f32 %v1678, %v1682
    %vm1684 = vweird.f32 %v1676
    %vm1685 = vweird.f32 %v1678
    %vm1686 = vmor %vm1684, %vm1685
    %v1687 = vsel %vm1686, %v1678, %v1683
    %v1688 = vrsqrt.pop %v1677
    %v1689 = vmul.f32 %v1688, %v1677
    %v1690 = vmul.f32 %v1689, %v1688
    %v1691 = vmul.f32 0.5, %v1690
    %v1692 = vsub.f32 1.5, %v1691
    %v1693 = vmul.f32 %v1688, %v1692
    %vm1694 = vweird.f32 %v1677
    %vm1695 = vweird.f32 %v1688
    %vm1696 = vmor %vm1694, %vm1695
    %v1697 = vsel %vm1696, %v1688, %v1693
    %v1698 = vmul.f32 %v1664, %v1687
    %v1699 = vmul.f32 %v1665, %v1697
    %s1700 = scalar_lea.vmem %s12, 1
    %v1701 = vld [vmem:[%s1700] sm:$0x1]
    %v1703 = vperm.slane %v1701, 0
    %v1705 = vmul.f32 %v1698, %v1703
    %v1706 = vmul.f32 %v1699, %v1703
    %s1707 = scalar_lea.vmem [#allocation10], 1
    %v1708 = vld [vmem:[%s1707] sm:$0x1]
    %v1710 = vperm.slane %v1708, 0
    %v1712 = vadd.f32 %v1705, %v1710
    %v1713 = vadd.f32 %v1706, %v1710
    %v1714 = vld [vmem:[#allocation11] sm:$0xff]
    %v1715 = vld [vmem:[#allocation11 + $0x8] sm:$0xff]
    %v1716 = vld [vmem:[#allocation11 + $0x10] sm:$0xff]
    %v1717 = vld [vmem:[#allocation11 + $0x18] sm:$0xff]
    %v1718 = vld [vmem:[%s15] sm:$0x1]
    %v1720 = vperm.slane %v1718, 0
    %v1723 = vsel %vm174, %v1712, 0
    %v1726 = vsel %vm174, %v1713, 0
    %1728 = vmatpush.msra.mxu0 0.0
    %1729 = vmatpush.msra.mxu0 0.0
    %1730 = vmatpush.msra.mxu0 0.0
    %1731 = vmatpush.msra.mxu0 0.0
    %1732 = vmatpush.msra.mxu0 0.0
    %1733 = vmatpush.msra.mxu0 0.0
    %1734 = vmatpush.msra.mxu0 0.0
    %1735 = vmatpush.msra.mxu0 0.0
    %1736 = vmatpush.msra.mxu0 0.0
    %1737 = vmatpush.msra.mxu0 0.0
    %1738 = vmatpush.msra.mxu0 0.0
    %1739 = vmatpush.msra.mxu0 0.0
    %1740 = vmatpush.msra.mxu0 %v1717
    %1741 = vmatpush.msra.mxu0 %v1716
    %1742 = vmatpush.msra.mxu0 %v1715
    %1743 = vmatpush.msra.mxu0 %v1714
    %1744 = vmatmul.f32.gmra.mxu0 %v1723
    %v1745 = vpop.f32.mrf.mxu0
    %v1746 = vadd.f32 %v1720, %v1745
    %1747 = vmatmul.f32.gmra.mxu0 %v1726
    %v1748 = vpop.f32.mrf.mxu0
    %v1749 = vadd.f32 %v1720, %v1748
    %1750 = vdwg.mxu0
    %1751 = vst [vmem:[#allocation13] sm:$0xff] %v1746
    %1752 = vst [vmem:[#allocation13 + $0x8] sm:$0xff] %v1749
    // Predicated region
    $region90: #{tpu_custom_call.1} parent=1 // pred_check
      _
    $region91: #{tpu_custom_call.1} parent=1 // pred_check_branch
      %1754 = sbr.rel (0) target = $region93
    $region92: #{tpu_custom_call.1} parent=1 // pred_region
      %1756 = vsyncadd [#allocation4], 0
      %s1757 = sshll.u32 [#allocation13], 4
      %s1758 = int_to_ptr.vmem [resolvable:$true] %s1757
      %s1759 = sshll.u32 %s16, 4
      %s1760 = int_to_ptr.hbm [resolvable:$true] %s1759
      %1765 = dma.vmem_to_hbm [thread:$0]  %s1758, 256, %s1760, [#allocation4], 128, 128, 8
    $region93: #{tpu_custom_call.1} parent=1 // pred_fallthru
      _
    // Predicated region
    $region94: #{tpu_custom_call.1} parent=1 // pred_check
      _
    $region95: #{tpu_custom_call.1} parent=1 // pred_check_branch
      %1767 = sbr.rel (0) target = $region97
    $region96: #{tpu_custom_call.1} parent=1 // pred_region
      %1769 = dma.done [#allocation4], 256
    $region97: #{tpu_custom_call.1} parent=1 // pred_fallthru
      _
    %1770 = vsyncpa [#allocation3], 1
    %1771 = vsyncpa [#allocation6], 1
    %1772 = vsyncpa [#allocation9], 1
    %1773 = vsyncpa [#allocation12], 1
    %1774 = vsyncpa [#allocation4], 1

</llo_original>
